<compile_context>
chip_gen: v7x
topology: tpu7x:2x2x1
jax: 0.10.0
libtpu: 0.0.40
codegen_flags: <defaults>
</compile_context>

<pallas_src>
import functools

import jax
import jax.numpy as jnp
from jax.experimental import pallas as pl
from jax.experimental.pallas import tpu as pltpu

EPS = 1e-5  # nn.InstanceNorm2d default eps


# ----------------------------------------------------------------------------
# Fused Pallas kernel: one grid step = one residual Scaled_Block for bt graphs
# ----------------------------------------------------------------------------
def _fgnn_block_kernel(depth, n, bt, mm_dtype,
                       x_ref, w0_ref, m1w_ref, m2w_ref, swx_ref, swm_ref,
                       bias_ref, last_w_ref, last_b_ref, out_ref, h_ref):
    """grid = (batch_groups, num_blocks); h_ref carries the activation.

    Layout: channel-major, lane-dense (C, bt*n*n) so every 1x1 conv / skip /
    final conv is a plain MXU matmul and every store is an unmasked vst.
    """
    C = x_ref.shape[0]
    P = n * n
    BP = bt * P
    k = pl.program_id(1)
    nb = pl.num_programs(1)

    @pl.when(k == 0)
    def _():
        h_ref[...] = x_ref[...]

    def mm(w, a):  # MXU matmul, f32 accumulation (weights pre-cast to mm_dtype)
        return jnp.dot(w, a, preferred_element_type=jnp.float32)

    h = h_ref[...]                          # (C, BP)  f32
    h_mm = h.astype(mm_dtype)               # hoisted: reused by depth-0 + skip

    w0 = w0_ref[...][0]                     # (2C, C)  fused [mlp1_0; mlp2_0]
    m1w = m1w_ref[...][0]                   # (depth, C, C)
    m2w = m2w_ref[...][0]
    swx = swx_ref[...][0]                   # (C, C)
    swm = swm_ref[...][0]                   # (C, C)   already scaled by 1/n
    biases = bias_ref[...][0]               # (C, 2*depth+1)  f32

    # ---- two depth-`depth` 1x1-conv/ReLU MLPs; depth-0 fused into one matmul
    h12 = mm(w0, h_mm)                                            # (2C, BP) f32
    t1 = jnp.maximum(h12[:C] + biases[:, 0:1], 0.0)
    t2 = jnp.maximum(h12[C:] + biases[:, depth:depth + 1], 0.0)
    t1m = t1.astype(mm_dtype)               # emit branch activations in mm_dtype
    t2m = t2.astype(mm_dtype)
    for d in range(1, depth):
        t1 = jnp.maximum(mm(m1w[d], t1m) + biases[:, d:d + 1], 0.0)
        t2 = jnp.maximum(mm(m2w[d], t2m)
                         + biases[:, depth + d:depth + d + 1], 0.0)
        t1m = t1.astype(mm_dtype)
        t2m = t2.astype(mm_dtype)

    # ---- per-(channel, sample) n x n spatial matmul (1/n folded into swm)
    h1s = t1m.reshape(C * bt, n, n)
    h2s = t2m.reshape(C * bt, n, n)
    mult = jnp.einsum("bik,bkj->bij", h1s, h2s,
                      preferred_element_type=jnp.float32)
    multf = mult.astype(mm_dtype).reshape(C, BP)

    # ---- SkipConnection without concat: split weight, two matmuls summed
    out = mm(swx, h_mm) + mm(swm, multf) + biases[:, 2 * depth:2 * depth + 1]

    # ---- InstanceNorm2d(affine=False): one-pass stats per (channel, sample)
    o = out.reshape(C * bt, P)
    mean = jnp.mean(o, axis=1, keepdims=True)
    var = jnp.mean(o * o, axis=1, keepdims=True) - mean * mean
    normed = ((o - mean) * jax.lax.rsqrt(var + EPS)).reshape(C, BP)

    h_new = h + normed                      # Res_Scaled_Model residual

    @pl.when(k != nb - 1)
    def _():
        h_ref[...] = h_new

    @pl.when(k == nb - 1)                   # final 1x1 conv (no activation)
    def _():
        out_ref[...] = (mm(last_w_ref[...], h_new.astype(mm_dtype))
                        + last_b_ref[...])


# ----------------------------------------------------------------------------
# Wrapper helpers
# ----------------------------------------------------------------------------
def _pick_block_batch(B, P, lane_budget=32768):
    """Per-step graph count: lane dim bt*P must be a multiple of 128 (or the
    full batch), stay within a lane budget, and keep >=4 (else >=2) grid steps
    on the parallel batch axis so the input DMA pipelines on both v7x cores."""
    aligned = [bt for bt in range(1, B + 1)
               if B % bt == 0 and ((bt * P) % 128 == 0 or bt == B)]
    if not aligned:
        # TODO(synk): pad the pixel axis to a multiple of 128 instead of
        # falling back to a single full-batch (possibly masked-store) block.
        return B
    fitting = [bt for bt in aligned if bt * P <= lane_budget] or [min(aligned)]
    for target in (4, 2):
        cands = [bt for bt in fitting if B // bt >= target]
        if cands:
            return max(cands)
    return max(fitting)


def _vmem_limit_bytes(frac=0.8):
    """Per-generation VMEM limit (~102 MiB on 128 MiB chips, ~51 MiB on v7x)."""
    try:
        cap = pltpu.get_tpu_info().vmem_capacity_bytes
    except Exception:
        cap = 128 * 1024 * 1024
    return int(cap * frac)


def _stack_params(params, n, mm_dtype):
    """Stack per-block weights into a few refs; fold 1/n into skip_wm; store
    matmul weights in mm_dtype (biases stay f32 for f32 elementwise math)."""
    blocks = params["blocks"]
    C = params["embedding"].shape[1]
    for blk in blocks:
        for w, _ in blk["mlp1"] + blk["mlp2"]:
            assert w.shape == (C, C), "all block conv layers must be (C, C)"
        assert blk["skip"][0].shape == (C, 2 * C)

    mlp1_w = jnp.stack([jnp.stack([w for w, _ in blk["mlp1"]])
                        for blk in blocks])                     # (nb, d, C, C)
    mlp2_w = jnp.stack([jnp.stack([w for w, _ in blk["mlp2"]])
                        for blk in blocks])
    w0 = jnp.concatenate([mlp1_w[:, 0], mlp2_w[:, 0]], axis=1)  # (nb, 2C, C)
    skip_w = jnp.stack([blk["skip"][0] for blk in blocks])      # (nb, C, 2C)
    skip_wx = skip_w[:, :, :C]
    skip_wm = skip_w[:, :, C:] * (1.0 / float(n))   # fold Scaled_Block's 1/n
    biases = jnp.stack([
        jnp.stack([b for _, b in blk["mlp1"]]
                  + [b for _, b in blk["mlp2"]]
                  + [blk["skip"][1]])
        for blk in blocks])                                     # (nb, 2d+1, C)
    biases_cm = jnp.transpose(biases, (0, 2, 1))                # (nb, C, 2d+1)
    return {
        "w0": w0.astype(mm_dtype),
        "mlp1_w": mlp1_w.astype(mm_dtype),
        "mlp2_w": mlp2_w.astype(mm_dtype),
        "skip_wx": skip_wx.astype(mm_dtype),
        "skip_wm": skip_wm.astype(mm_dtype),
        "biases": biases_cm.astype(jnp.float32),
        "last_w": params["last_w"].astype(mm_dtype),
        "last_b": params["last_b"].reshape(-1, 1).astype(jnp.float32),
    }


def rs_edge_embedding_forward(x, params, *, block_batch=None,
                              mm_dtype=jnp.bfloat16):
    """Forward of RS_Edge_Embedding.

    x: (B, n, n, original_features_num); feature channel 1 holds {0,1}.
    returns: (B, n, n, out_features)
    """
    assert x.shape[3] == params["original_features_num"]

    # TODO(synk): the nn.Embedding gather has no clean Pallas equivalent at
    # these sizes; keep the lookup + layout glue in plain JAX.
    idx = x[:, :, :, 1].astype(jnp.int32)
    h = jnp.take(params["embedding"], idx, axis=0)       # (B, n, n, C)
    B, n, _, C = h.shape
    P = n * n
    # channel-major, lane-dense 2-D activation: (C, B*n*n)
    h2d = jnp.transpose(h, (3, 0, 1, 2)).reshape(C, B * P).astype(jnp.float32)

    stacked = _stack_params(params, n, mm_dtype)
    num_blocks, depth = stacked["mlp1_w"].shape[:2]
    Cout = stacked["last_w"].shape[0]

    bt = _pick_block_batch(B, P) if block_batch is None else block_batch
    grid = (B // bt, num_blocks)

    kernel = functools.partial(_fgnn_block_kernel, depth, n, bt, mm_dtype)

    out2d = pl.pallas_call(
        kernel,
        out_shape=jax.ShapeDtypeStruct((Cout, B * P), jnp.float32),
        grid=grid,
        in_specs=[
            pl.BlockSpec((C, bt * P), lambda b, k: (0, b)),              # x
            pl.BlockSpec((1, 2 * C, C), lambda b, k: (k, 0, 0)),         # w0
            pl.BlockSpec((1, depth, C, C), lambda b, k: (k, 0, 0, 0)),   # mlp1
            pl.BlockSpec((1, depth, C, C), lambda b, k: (k, 0, 0, 0)),   # mlp2
            pl.BlockSpec((1, C, C), lambda b, k: (k, 0, 0)),             # sw_x
            pl.BlockSpec((1, C, C), lambda b, k: (k, 0, 0)),             # sw_m
            pl.BlockSpec((1, C, 2 * depth + 1), lambda b, k: (k, 0, 0)), # bias
            pl.BlockSpec((Cout, C), lambda b, k: (0, 0)),                # last_w
            pl.BlockSpec((Cout, 1), lambda b, k: (0, 0)),                # last_b
        ],
        out_specs=pl.BlockSpec((Cout, bt * P), lambda b, k: (0, b)),
        scratch_shapes=[pltpu.VMEM((C, bt * P), jnp.float32)],
        compiler_params=pltpu.CompilerParams(
            dimension_semantics=("parallel", "arbitrary"),
            vmem_limit_bytes=_vmem_limit_bytes()),
    )(h2d, stacked["w0"], stacked["mlp1_w"], stacked["mlp2_w"],
      stacked["skip_wx"], stacked["skip_wm"], stacked["biases"],
      stacked["last_w"], stacked["last_b"])

    # (Cout, B*P) -> (B, n, n, Cout)
    return jnp.transpose(out2d.reshape(Cout, B, n, n), (1, 2, 3, 0))


# ----------------------------------------------------------------------------
# Pure-JAX reference (mm_dtype-matched, for correctness checks)
# ----------------------------------------------------------------------------
def reference_forward(x, params, mm_dtype=jnp.float32):
    idx = x[:, :, :, 1].astype(jnp.int32)
    h = params["embedding"][idx]
    h = jnp.transpose(h, (0, 3, 1, 2)).astype(jnp.float32)
    n = h.shape[-1]

    def conv1x1(w, b, t):
        y = jnp.einsum("oc,bcij->boij", w.astype(mm_dtype), t.astype(mm_dtype),
                       preferred_element_type=jnp.float32)
        return y + b[None, :, None, None]

    for blk in params["blocks"]:
        def run_mlp(t, ps):
            for w, b in ps:
                t = jax.nn.relu(conv1x1(w, b, t))
            return t

        m1 = run_mlp(h, blk["mlp1"])
        m2 = run_mlp(h, blk["mlp2"])
        mult = jnp.einsum("bcik,bckj->bcij",
                          m1.astype(mm_dtype), m2.astype(mm_dtype),
                          preferred_element_type=jnp.float32) / float(n)
        cat = jnp.concatenate([h, mult], axis=1)
        sw, sb = blk["skip"]
        out = conv1x1(sw, sb, cat)
        mean = out.mean(axis=(2, 3), keepdims=True)
        var = ((out - mean) ** 2).mean(axis=(2, 3), keepdims=True)
        out = (out - mean) / jnp.sqrt(var + EPS)
        h = h + out
    out = conv1x1(params["last_w"], params["last_b"], h)
    return jnp.transpose(out, (0, 2, 3, 1))


# ----------------------------------------------------------------------------
# Deterministic parameter construction
# ----------------------------------------------------------------------------
def make_params(key, original_features_num, num_blocks, in_features,
                out_features, depth_of_mlp):
    def nrm(k, shape, scale=0.2):
        return scale * jax.random.normal(k, shape, jnp.float32)

    keys = iter(jax.random.split(key, 4 * num_blocks * depth_of_mlp
                                 + 4 * num_blocks + 8))
    params = {
        "original_features_num": original_features_num,
        "embedding": nrm(next(keys), (2, in_features)),
        "blocks": [],
        "last_w": nrm(next(keys), (out_features, in_features)),
        "last_b": nrm(next(keys), (out_features,)),
    }
    last = in_features  # embed=True -> first block already sees in_features
    for _ in range(num_blocks):
        blk = {"mlp1": [], "mlp2": [], "skip": None}
        cin = last
        for _ in range(depth_of_mlp):
            blk["mlp1"].append((nrm(next(keys), (in_features, cin)),
                                nrm(next(keys), (in_features,))))
            cin = in_features
        cin = last
        for _ in range(depth_of_mlp):
            blk["mlp2"].append((nrm(next(keys), (in_features, cin)),
                                nrm(next(keys), (in_features,))))
            cin = in_features
        blk["skip"] = (
            nrm(next(keys), (in_features, last + in_features)),
            nrm(next(keys), (in_features,)),
        )
        params["blocks"].append(blk)
        last = in_features
    return params


# ----------------------------------------------------------------------------
if __name__ == "__main__":
    B, n_vertices = 2, 16
    original_features_num = 2
    num_blocks = 2
    in_features = 8
    out_features = 4
    depth_of_mlp = 2

    root = jax.random.PRNGKey(0)
    k_par, k_adj, k_feat = jax.random.split(root, 3)

    params = make_params(k_par, original_features_num, num_blocks,
                         in_features, out_features, depth_of_mlp)

    # input graphs: (B, n, n, original_features_num); channel 1 is 0/1 adjacency
    adj = jax.random.bernoulli(k_adj, 0.5,
                               (B, n_vertices, n_vertices)).astype(jnp.float32)
    other = jax.random.normal(k_feat, (B, n_vertices, n_vertices), jnp.float32)
    x = jnp.stack([other, adj], axis=-1)  # (2, 16, 16, 2)

    # default path: bf16 MXU operands, checked against a bf16-matched reference
    out_bf16 = jax.block_until_ready(rs_edge_embedding_forward(x, params))
    ref_bf16 = jax.block_until_ready(
        reference_forward(x, params, mm_dtype=jnp.bfloat16))
    assert out_bf16.shape == (B, n_vertices, n_vertices, out_features), \
        out_bf16.shape
    assert jnp.allclose(out_bf16, ref_bf16, atol=2e-2, rtol=2e-2), \
        float(jnp.max(jnp.abs(out_bf16 - ref_bf16)))

    # f32 MXU operands: tight check against the pure-f32 reference
    out_f32 = jax.block_until_ready(
        rs_edge_embedding_forward(x, params, mm_dtype=jnp.float32))
    ref_f32 = jax.block_until_ready(
        reference_forward(x, params, mm_dtype=jnp.float32))
    assert jnp.allclose(out_f32, ref_f32, atol=1e-3, rtol=1e-3), \
        float(jnp.max(jnp.abs(out_f32 - ref_f32)))

    print("KERNEL_OK")
</pallas_src>

<mosaic_0001>
module attributes {stable_mosaic.version = 11 : i64} {
  func.func @_fgnn_block_kernel(%arg0: i32, %arg1: i32, %arg2: memref<8x256xf32, #tpu.memory_space<vmem>>, %arg3: memref<1x16x8xbf16, #tpu.memory_space<vmem>>, %arg4: memref<1x2x8x8xbf16, #tpu.memory_space<vmem>>, %arg5: memref<1x2x8x8xbf16, #tpu.memory_space<vmem>>, %arg6: memref<1x8x8xbf16, #tpu.memory_space<vmem>>, %arg7: memref<1x8x8xbf16, #tpu.memory_space<vmem>>, %arg8: memref<1x8x5xf32, #tpu.memory_space<vmem>>, %arg9: memref<4x8xbf16, #tpu.memory_space<vmem>>, %arg10: memref<4x1xf32, #tpu.memory_space<vmem>>, %arg11: memref<4x256xf32, #tpu.memory_space<vmem>>, %arg12: memref<8x256xf32, #tpu.memory_space<vmem>>) attributes {dimension_semantics = [#tpu.dimension_semantics<parallel>, #tpu.dimension_semantics<arbitrary>], iteration_bounds = array<i64: 2, 2>, scalar_prefetch = 0 : i64, scratch_operands = 1 : i64, tpu.core_type = #tpu.core_type<tc>, window_params = [{transform_indices = @transform_0, window_bounds = array<i64: 8, 256>}, {transform_indices = @transform_1, window_bounds = array<i64: 1, 16, 8>}, {transform_indices = @transform_2, window_bounds = array<i64: 1, 2, 8, 8>}, {transform_indices = @transform_3, window_bounds = array<i64: 1, 2, 8, 8>}, {transform_indices = @transform_4, window_bounds = array<i64: 1, 8, 8>}, {transform_indices = @transform_5, window_bounds = array<i64: 1, 8, 8>}, {transform_indices = @transform_6, window_bounds = array<i64: 1, 8, 5>}, {pipeline_mode = #tpu.pipeline_mode<synchronous>, transform_indices = @transform_7, window_bounds = array<i64: 4, 8>}, {pipeline_mode = #tpu.pipeline_mode<synchronous>, transform_indices = @transform_8, window_bounds = array<i64: 4, 1>}, {transform_indices = @transform_9, window_bounds = array<i64: 4, 256>}]} {
    %c0_i32 = arith.constant 0 : i32
    %0 = arith.cmpi eq, %arg1, %c0_i32 : i32
    %1 = arith.extui %0 : i1 to i32
    %c0_i32_0 = arith.constant 0 : i32
    %2 = arith.cmpi ne, %1, %c0_i32_0 : i32
    scf.if %2 {
      %c0_39 = arith.constant 0 : index
      %c0_40 = arith.constant 0 : index
      %86 = vector.load %arg2[%c0_39, %c0_40] : memref<8x256xf32, #tpu.memory_space<vmem>>, vector<8x256xf32>
      %c0_41 = arith.constant 0 : index
      %c0_42 = arith.constant 0 : index
      %87 = vector.load %arg12[%c0_41, %c0_42] : memref<8x256xf32, #tpu.memory_space<vmem>>, vector<8x256xf32>
      tpu.vector_store %arg12[%c0_41, %c0_42], %86 {strides = array<i32>} : memref<8x256xf32, #tpu.memory_space<vmem>>, vector<8x256xf32>,
    } else {
    }
    %c0 = arith.constant 0 : index
    %c0_1 = arith.constant 0 : index
    %3 = vector.load %arg12[%c0, %c0_1] : memref<8x256xf32, #tpu.memory_space<vmem>>, vector<8x256xf32>
    %4 = arith.truncf %3 : vector<8x256xf32> to vector<8x256xbf16>
    %c0_2 = arith.constant 0 : index
    %c0_3 = arith.constant 0 : index
    %c0_4 = arith.constant 0 : index
    %5 = vector.load %arg3[%c0_2, %c0_3, %c0_4] : memref<1x16x8xbf16, #tpu.memory_space<vmem>>, vector<1x16x8xbf16>
    %6 = vector.shape_cast %5 : vector<1x16x8xbf16> to vector<16x8xbf16>
    %c0_5 = arith.constant 0 : index
    %c0_6 = arith.constant 0 : index
    %c0_7 = arith.constant 0 : index
    %c0_8 = arith.constant 0 : index
    %7 = vector.load %arg4[%c0_5, %c0_6, %c0_7, %c0_8] : memref<1x2x8x8xbf16, #tpu.memory_space<vmem>>, vector<1x2x8x8xbf16>
    %8 = vector.shape_cast %7 : vector<1x2x8x8xbf16> to vector<2x8x8xbf16>
    %c0_9 = arith.constant 0 : index
    %c0_10 = arith.constant 0 : index
    %c0_11 = arith.constant 0 : index
    %c0_12 = arith.constant 0 : index
    %9 = vector.load %arg5[%c0_9, %c0_10, %c0_11, %c0_12] : memref<1x2x8x8xbf16, #tpu.memory_space<vmem>>, vector<1x2x8x8xbf16>
    %10 = vector.shape_cast %9 : vector<1x2x8x8xbf16> to vector<2x8x8xbf16>
    %c0_13 = arith.constant 0 : index
    %c0_14 = arith.constant 0 : index
    %c0_15 = arith.constant 0 : index
    %11 = vector.load %arg6[%c0_13, %c0_14, %c0_15] : memref<1x8x8xbf16, #tpu.memory_space<vmem>>, vector<1x8x8xbf16>
    %12 = vector.shape_cast %11 : vector<1x8x8xbf16> to vector<8x8xbf16>
    %c0_16 = arith.constant 0 : index
    %c0_17 = arith.constant 0 : index
    %c0_18 = arith.constant 0 : index
    %13 = vector.load %arg7[%c0_16, %c0_17, %c0_18] : memref<1x8x8xbf16, #tpu.memory_space<vmem>>, vector<1x8x8xbf16>
    %14 = vector.shape_cast %13 : vector<1x8x8xbf16> to vector<8x8xbf16>
    %c0_19 = arith.constant 0 : index
    %c0_20 = arith.constant 0 : index
    %c0_21 = arith.constant 0 : index
    %15 = vector.load %arg8[%c0_19, %c0_20, %c0_21] : memref<1x8x5xf32, #tpu.memory_space<vmem>>, vector<1x8x5xf32>
    %16 = vector.shape_cast %15 : vector<1x8x5xf32> to vector<8x5xf32>
    %cst = arith.constant dense<0.000000e+00> : vector<16x256xf32>
    %17 = tpu.matmul %6, %4, %cst {dimension_numbers = #tpu.dot_dimension_numbers<[1], [0], [0], [1], [0, 0, 1, 1], [], []>} : vector<16x8xbf16>, vector<8x256xbf16>, vector<16x256xf32> -> vector<16x256xf32>
    %18 = vector.extract_strided_slice %17 {offsets = [0, 0], sizes = [8, 256], strides = [1, 1]} : vector<16x256xf32> to vector<8x256xf32>
    %19 = vector.extract_strided_slice %16 {offsets = [0, 0], sizes = [8, 1], strides = [1, 1]} : vector<8x5xf32> to vector<8x1xf32>
    %20 = vector.broadcast %19 : vector<8x1xf32> to vector<8x256xf32>
    %21 = arith.addf %18, %20 : vector<8x256xf32>
    %cst_22 = arith.constant 0.000000e+00 : f32
    %22 = vector.broadcast %cst_22 : f32 to vector<8x256xf32>
    %23 = arith.maximumf %21, %22 : vector<8x256xf32>
    %24 = vector.extract_strided_slice %17 {offsets = [8, 0], sizes = [8, 256], strides = [1, 1]} : vector<16x256xf32> to vector<8x256xf32>
    %25 = vector.extract_strided_slice %16 {offsets = [0, 2], sizes = [8, 1], strides = [1, 1]} : vector<8x5xf32> to vector<8x1xf32>
    %26 = vector.broadcast %25 : vector<8x1xf32> to vector<8x256xf32>
    %27 = arith.addf %24, %26 : vector<8x256xf32>
    %cst_23 = arith.constant 0.000000e+00 : f32
    %28 = vector.broadcast %cst_23 : f32 to vector<8x256xf32>
    %29 = arith.maximumf %27, %28 : vector<8x256xf32>
    %30 = arith.truncf %23 : vector<8x256xf32> to vector<8x256xbf16>
    %31 = arith.truncf %29 : vector<8x256xf32> to vector<8x256xbf16>
    %32 = vector.extract_strided_slice %8 {offsets = [1, 0, 0], sizes = [1, 8, 8], strides = [1, 1, 1]} : vector<2x8x8xbf16> to vector<1x8x8xbf16>
    %33 = vector.shape_cast %32 : vector<1x8x8xbf16> to vector<8x8xbf16>
    %cst_24 = arith.constant dense<0.000000e+00> : vector<8x256xf32>
    %34 = tpu.matmul %33, %30, %cst_24 {dimension_numbers = #tpu.dot_dimension_numbers<[1], [0], [0], [1], [0, 0, 1, 1], [], []>} : vector<8x8xbf16>, vector<8x256xbf16>, vector<8x256xf32> -> vector<8x256xf32>
    %35 = vector.extract_strided_slice %16 {offsets = [0, 1], sizes = [8, 1], strides = [1, 1]} : vector<8x5xf32> to vector<8x1xf32>
    %36 = vector.broadcast %35 : vector<8x1xf32> to vector<8x256xf32>
    %37 = arith.addf %34, %36 : vector<8x256xf32>
    %cst_25 = arith.constant 0.000000e+00 : f32
    %38 = vector.broadcast %cst_25 : f32 to vector<8x256xf32>
    %39 = arith.maximumf %37, %38 : vector<8x256xf32>
    %40 = vector.extract_strided_slice %10 {offsets = [1, 0, 0], sizes = [1, 8, 8], strides = [1, 1, 1]} : vector<2x8x8xbf16> to vector<1x8x8xbf16>
    %41 = vector.shape_cast %40 : vector<1x8x8xbf16> to vector<8x8xbf16>
    %cst_26 = arith.constant dense<0.000000e+00> : vector<8x256xf32>
    %42 = tpu.matmul %41, %31, %cst_26 {dimension_numbers = #tpu.dot_dimension_numbers<[1], [0], [0], [1], [0, 0, 1, 1], [], []>} : vector<8x8xbf16>, vector<8x256xbf16>, vector<8x256xf32> -> vector<8x256xf32>
    %43 = vector.extract_strided_slice %16 {offsets = [0, 3], sizes = [8, 1], strides = [1, 1]} : vector<8x5xf32> to vector<8x1xf32>
    %44 = vector.broadcast %43 : vector<8x1xf32> to vector<8x256xf32>
    %45 = arith.addf %42, %44 : vector<8x256xf32>
    %cst_27 = arith.constant 0.000000e+00 : f32
    %46 = vector.broadcast %cst_27 : f32 to vector<8x256xf32>
    %47 = arith.maximumf %45, %46 : vector<8x256xf32>
    %48 = arith.truncf %39 : vector<8x256xf32> to vector<8x256xbf16>
    %49 = arith.truncf %47 : vector<8x256xf32> to vector<8x256xbf16>
    %50 = vector.shape_cast %48 : vector<8x256xbf16> to vector<8x16x16xbf16>
    %51 = vector.shape_cast %49 : vector<8x256xbf16> to vector<8x16x16xbf16>
    "tpu.trace_start"() <{level = 10 : i32, message = "bik,bkj->bij"}> : () -> ()
    %cst_28 = arith.constant dense<0.000000e+00> : vector<8x16x16xf32>
    %52 = tpu.matmul %50, %51, %cst_28 {dimension_numbers = #tpu.dot_dimension_numbers<[2], [1], [1], [2], [0, 0, 0, 1, 1, 2], [0], [0]>} : vector<8x16x16xbf16>, vector<8x16x16xbf16>, vector<8x16x16xf32> -> vector<8x16x16xf32>
    "tpu.trace_stop"() : () -> ()
    %53 = arith.truncf %52 : vector<8x16x16xf32> to vector<8x16x16xbf16>
    %54 = vector.shape_cast %53 : vector<8x16x16xbf16> to vector<8x256xbf16>
    %cst_29 = arith.constant dense<0.000000e+00> : vector<8x256xf32>
    %55 = tpu.matmul %12, %4, %cst_29 {dimension_numbers = #tpu.dot_dimension_numbers<[1], [0], [0], [1], [0, 0, 1, 1], [], []>} : vector<8x8xbf16>, vector<8x256xbf16>, vector<8x256xf32> -> vector<8x256xf32>
    %cst_30 = arith.constant dense<0.000000e+00> : vector<8x256xf32>
    %56 = tpu.matmul %14, %54, %cst_30 {dimension_numbers = #tpu.dot_dimension_numbers<[1], [0], [0], [1], [0, 0, 1, 1], [], []>} : vector<8x8xbf16>, vector<8x256xbf16>, vector<8x256xf32> -> vector<8x256xf32>
    %57 = arith.addf %55, %56 : vector<8x256xf32>
    %58 = vector.extract_strided_slice %16 {offsets = [0, 4], sizes = [8, 1], strides = [1, 1]} : vector<8x5xf32> to vector<8x1xf32>
    %59 = vector.broadcast %58 : vector<8x1xf32> to vector<8x256xf32>
    %60 = arith.addf %57, %59 : vector<8x256xf32>
    %cst_31 = arith.constant dense<0.000000e+00> : vector<8xf32>
    %61 = vector.multi_reduction <add>, %60, %cst_31 [1] : vector<8x256xf32> to vector<8xf32>
    %62 = vector.shape_cast %61 : vector<8xf32> to vector<8x1xf32>
    %cst_32 = arith.constant 2.560000e+02 : f32
    %63 = vector.broadcast %cst_32 : f32 to vector<8x1xf32>
    %64 = arith.divf %62, %63 : vector<8x1xf32>
    %65 = arith.mulf %60, %60 : vector<8x256xf32>
    %cst_33 = arith.constant dense<0.000000e+00> : vector<8xf32>
    %66 = vector.multi_reduction <add>, %65, %cst_33 [1] : vector<8x256xf32> to vector<8xf32>
    %67 = vector.shape_cast %66 : vector<8xf32> to vector<8x1xf32>
    %cst_34 = arith.constant 2.560000e+02 : f32
    %68 = vector.broadcast %cst_34 : f32 to vector<8x1xf32>
    %69 = arith.divf %67, %68 : vector<8x1xf32>
    %70 = arith.mulf %64, %64 : vector<8x1xf32>
    %71 = arith.subf %69, %70 : vector<8x1xf32>
    %72 = vector.broadcast %64 : vector<8x1xf32> to vector<8x256xf32>
    %73 = arith.subf %60, %72 : vector<8x256xf32>
    %cst_35 = arith.constant 9.99999974E-6 : f32
    %74 = vector.broadcast %cst_35 : f32 to vector<8x1xf32>
    %75 = arith.addf %71, %74 : vector<8x1xf32>
    %76 = math.rsqrt %75 : vector<8x1xf32>
    %77 = vector.broadcast %76 : vector<8x1xf32> to vector<8x256xf32>
    %78 = arith.mulf %73, %77 : vector<8x256xf32>
    %79 = arith.addf %3, %78 : vector<8x256xf32>
    %c1_i32 = arith.constant 1 : i32
    %80 = arith.cmpi ne, %arg1, %c1_i32 : i32
    %81 = arith.extui %80 : i1 to i32
    %c0_i32_36 = arith.constant 0 : i32
    %82 = arith.cmpi ne, %81, %c0_i32_36 : i32
    scf.if %82 {
      %c0_39 = arith.constant 0 : index
      %c0_40 = arith.constant 0 : index
      %86 = vector.load %arg12[%c0_39, %c0_40] : memref<8x256xf32, #tpu.memory_space<vmem>>, vector<8x256xf32>
      tpu.vector_store %arg12[%c0_39, %c0_40], %79 {strides = array<i32>} : memref<8x256xf32, #tpu.memory_space<vmem>>, vector<8x256xf32>,
    } else {
    }
    %c1_i32_37 = arith.constant 1 : i32
    %83 = arith.cmpi eq, %arg1, %c1_i32_37 : i32
    %84 = arith.extui %83 : i1 to i32
    %c0_i32_38 = arith.constant 0 : i32
    %85 = arith.cmpi ne, %84, %c0_i32_38 : i32
    scf.if %85 {
      %c0_39 = arith.constant 0 : index
      %c0_40 = arith.constant 0 : index
      %86 = vector.load %arg9[%c0_39, %c0_40] : memref<4x8xbf16, #tpu.memory_space<vmem>>, vector<4x8xbf16>
      %87 = arith.truncf %79 : vector<8x256xf32> to vector<8x256xbf16>
      %cst_41 = arith.constant dense<0.000000e+00> : vector<4x256xf32>
      %88 = tpu.matmul %86, %87, %cst_41 {dimension_numbers = #tpu.dot_dimension_numbers<[1], [0], [0], [1], [0, 0, 1, 1], [], []>} : vector<4x8xbf16>, vector<8x256xbf16>, vector<4x256xf32> -> vector<4x256xf32>
      %c0_42 = arith.constant 0 : index
      %c0_43 = arith.constant 0 : index
      %89 = vector.load %arg10[%c0_42, %c0_43] : memref<4x1xf32, #tpu.memory_space<vmem>>, vector<4x1xf32>
      %90 = vector.broadcast %89 : vector<4x1xf32> to vector<4x256xf32>
      %91 = arith.addf %88, %90 : vector<4x256xf32>
      %c0_44 = arith.constant 0 : index
      %c0_45 = arith.constant 0 : index
      %92 = vector.load %arg11[%c0_44, %c0_45] : memref<4x256xf32, #tpu.memory_space<vmem>>, vector<4x256xf32>
      tpu.vector_store %arg11[%c0_44, %c0_45], %91 {strides = array<i32>} : memref<4x256xf32, #tpu.memory_space<vmem>>, vector<4x256xf32>,
    } else {
    }
    return
  }
  func.func @transform_0(%arg0: i32, %arg1: i32) -> (i32, i32) {
    %c0_i32 = arith.constant 0 : i32
    %c0_i32_0 = arith.constant 0 : i32
    return %c0_i32, %arg0 : i32, i32
  }
  func.func @transform_1(%arg0: i32, %arg1: i32) -> (i32, i32, i32) {
    %c0_i32 = arith.constant 0 : i32
    %c0_i32_0 = arith.constant 0 : i32
    %c0_i32_1 = arith.constant 0 : i32
    return %arg1, %c0_i32, %c0_i32_0 : i32, i32, i32
  }
  func.func @transform_2(%arg0: i32, %arg1: i32) -> (i32, i32, i32, i32) {
    %c0_i32 = arith.constant 0 : i32
    %c0_i32_0 = arith.constant 0 : i32
    %c0_i32_1 = arith.constant 0 : i32
    %c0_i32_2 = arith.constant 0 : i32
    return %arg1, %c0_i32, %c0_i32_0, %c0_i32_1 : i32, i32, i32, i32
  }
  func.func @transform_3(%arg0: i32, %arg1: i32) -> (i32, i32, i32, i32) {
    %c0_i32 = arith.constant 0 : i32
    %c0_i32_0 = arith.constant 0 : i32
    %c0_i32_1 = arith.constant 0 : i32
    %c0_i32_2 = arith.constant 0 : i32
    return %arg1, %c0_i32, %c0_i32_0, %c0_i32_1 : i32, i32, i32, i32
  }
  func.func @transform_4(%arg0: i32, %arg1: i32) -> (i32, i32, i32) {
    %c0_i32 = arith.constant 0 : i32
    %c0_i32_0 = arith.constant 0 : i32
    %c0_i32_1 = arith.constant 0 : i32
    return %arg1, %c0_i32, %c0_i32_0 : i32, i32, i32
  }
  func.func @transform_5(%arg0: i32, %arg1: i32) -> (i32, i32, i32) {
    %c0_i32 = arith.constant 0 : i32
    %c0_i32_0 = arith.constant 0 : i32
    %c0_i32_1 = arith.constant 0 : i32
    return %arg1, %c0_i32, %c0_i32_0 : i32, i32, i32
  }
  func.func @transform_6(%arg0: i32, %arg1: i32) -> (i32, i32, i32) {
    %c0_i32 = arith.constant 0 : i32
    %c0_i32_0 = arith.constant 0 : i32
    %c0_i32_1 = arith.constant 0 : i32
    return %arg1, %c0_i32, %c0_i32_0 : i32, i32, i32
  }
  func.func @transform_7(%arg0: i32, %arg1: i32) -> (i32, i32) {
    %c0_i32 = arith.constant 0 : i32
    %c0_i32_0 = arith.constant 0 : i32
    %c0_i32_1 = arith.constant 0 : i32
    return %c0_i32, %c0_i32_0 : i32, i32
  }
  func.func @transform_8(%arg0: i32, %arg1: i32) -> (i32, i32) {
    %c0_i32 = arith.constant 0 : i32
    %c0_i32_0 = arith.constant 0 : i32
    %c0_i32_1 = arith.constant 0 : i32
    return %c0_i32, %c0_i32_0 : i32, i32
  }
  func.func @transform_9(%arg0: i32, %arg1: i32) -> (i32, i32) {
    %c0_i32 = arith.constant 0 : i32
    %c0_i32_0 = arith.constant 0 : i32
    return %c0_i32, %arg0 : i32, i32
  }
}

</mosaic_0001>

<llo_original>
// kernel: tpu_custom_call.1
$region0: #{tpu_custom_call.1}
  #allocation0 [shape = 'u32[]', space=smem, size = 0x4, offset = 0x4, fixed_abs, tag = 'smem constant byte address 0x4 - core index']
  #allocation1 [shape = 'u32[144,128]{1,0:T(1,128)}', space=vmem, size = 0x12000, scoped, tag = 'internal scratch']
  #allocation2 [shape = 'f32[8,256]{1,0:T(8,128)}', space=vmem, size = 0x2000, scoped, tag = 'scratch operand']
  %s0 = inlined_call_operand.hbm [shape: f32[8,512], index: 0, kind: input, shape index: {}]
  %s1 = inlined_call_operand.hbm [shape: bf16[2,16,8], index: 1, kind: input, shape index: {}]
  %s2 = inlined_call_operand.hbm [shape: bf16[2,2,8,8], index: 2, kind: input, shape index: {}]
  %s3 = inlined_call_operand.hbm [shape: bf16[2,2,8,8], index: 3, kind: input, shape index: {}]
  %s4 = inlined_call_operand.hbm [shape: bf16[2,8,8], index: 4, kind: input, shape index: {}]
  %s5 = inlined_call_operand.hbm [shape: bf16[2,8,8], index: 5, kind: input, shape index: {}]
  %s6 = inlined_call_operand.hbm [shape: f32[2,8,5], index: 6, kind: input, shape index: {}]
  %s7 = inlined_call_operand.hbm [shape: bf16[4,8], index: 7, kind: input, shape index: {}]
  %s8 = inlined_call_operand.hbm [shape: f32[4,1], index: 8, kind: input, shape index: {}]
  %s9 = inlined_call_operand.hbm [shape: f32[4,512], index: 9, kind: output, shape index: {}]
  %s10 = sld [smem:[#allocation0]]
  $region117: #{tpu_custom_call.1} parent=0
    _
  %s12 = ssub.s32 1, %s10
  %s13 = scalar_select 0, %s12, %s10
  $region1: #{tpu_custom_call.1} parent=0
    #allocation3 [shape = 'u8[16384]{0}', space=vmem, size = 0x4000, scoped, tag = 'input window, operand 0']
    #allocation4 [shape = 's32[2]{0}', space=sflag, size = 0x8, scoped, tag = 'scoped memory for tpu_custom_call.1']
    #allocation5 [shape = 's32[2]{0}', space=sflag, size = 0x8, scoped, tag = 'scoped memory for tpu_custom_call.1']
    #allocation6 [shape = 'u8[8192]{0}', space=vmem, size = 0x2000, scoped, tag = 'input window, operand 1']
    #allocation7 [shape = 's32[2]{0}', space=sflag, size = 0x8, scoped, tag = 'scoped memory for tpu_custom_call.1']
    #allocation8 [shape = 'u8[8192]{0}', space=vmem, size = 0x2000, scoped, tag = 'input window, operand 2']
    #allocation9 [shape = 'u8[8192]{0}', space=vmem, size = 0x2000, scoped, tag = 'input window, operand 3']
    #allocation10 [shape = 's32[2]{0}', space=sflag, size = 0x8, scoped, tag = 'scoped memory for tpu_custom_call.1']
    #allocation11 [shape = 'u8[4096]{0}', space=vmem, size = 0x1000, scoped, tag = 'input window, operand 4']
    #allocation12 [shape = 'u8[4096]{0}', space=vmem, size = 0x1000, scoped, tag = 'input window, operand 5']
    #allocation13 [shape = 's32[2]{0}', space=sflag, size = 0x8, scoped, tag = 'scoped memory for tpu_custom_call.1']
    #allocation14 [shape = 'u8[8192]{0}', space=vmem, size = 0x2000, scoped, tag = 'input window, operand 6']
    #allocation15 [shape = 'u8[1024]{0}', space=vmem, size = 0x400, scoped, tag = 'input window, operand 7, single buffered']
    #allocation16 [shape = 's32[1]{0}', space=sflag, size = 0x4, scoped, tag = 'scoped memory for tpu_custom_call.1']
    #allocation17 [shape = 'u8[2048]{0}', space=vmem, size = 0x800, scoped, tag = 'input window, operand 8, single buffered']
    #allocation18 [shape = 'u8[8192]{0}', space=vmem, size = 0x2000, scoped, tag = 'output window, operand 0']
    %14 = vsyncpa [#allocation4], 0
    %s15 = scalar_lea.sflag [#allocation4], 1
    %16 = vsyncpa %s15, 0
    %17 = vsyncpa [#allocation7], 0
    %s18 = scalar_lea.sflag [#allocation7], 1
    %19 = vsyncpa %s18, 0
    %20 = vsyncpa [#allocation10], 0
    %s21 = scalar_lea.sflag [#allocation10], 1
    %22 = vsyncpa %s21, 0
    %23 = vsyncpa [#allocation13], 0
    %s24 = scalar_lea.sflag [#allocation13], 1
    %25 = vsyncpa %s24, 0
    %26 = vsyncpa [#allocation16], 0
    %27 = vsyncpa [#allocation5], 0
    %s28 = scalar_lea.sflag [#allocation5], 1
    %29 = vsyncpa %s28, 0
    loop: start=0, step=1, limit=6
    $region2: #{tpu_custom_call.1} parent=1 // loop_pre_header
      _
    $region3: #{tpu_custom_call.1} parent=1 // loop_header
      %s31 = sphi 0, %s35
      %p32 = scmp.ge.s32.totalorder %s31, 6
      %s38 = sphi 0, %s50
      %s39 = sphi 0, %s46
      %s40 = sphi 0, %s38
      %s41 = sphi 0, %s39
      %s42 = sphi 0, %s40
      %s43 = sphi 0, %s41
      %s53 = sphi 0, %s55
      %s56 = sphi 0, %s53
      %s57 = sphi 0, %s56
      %s73 = sphi 0, %s57
      %s79 = sphi 0, %s81
      %s82 = sphi 0, %s79
      %s83 = sphi 0, %s82
      %s99 = sphi 0, %s83
      %s105 = sphi 0, %s107
      %s108 = sphi 0, %s105
      %s109 = sphi 0, %s108
      %s125 = sphi 0, %s109
      %s131 = sphi 0, %s133
      %s134 = sphi 0, %s131
      %s135 = sphi 0, %s134
      %s151 = sphi 0, %s135
      %s157 = sphi 0, %s159
      %s160 = sphi 0, %s157
      %s161 = sphi 0, %s160
      %s177 = sphi 0, %s161
      %s183 = sphi 0, %s185
      %s186 = sphi 0, %s183
      %s187 = sphi 0, %s186
      %s203 = sphi 0, %s187
      %s209 = sphi 0, %s211
      %s212 = sphi 0, %s209
      %s213 = sphi 0, %s212
      %s229 = sphi 0, %s213
      %s233 = sphi 0, %s233
      %s235 = sphi 0, %s233
      %s236 = sphi 0, %s235
      %s250 = sphi 0, %s236
      %s254 = sphi 0, %s254
      %s256 = sphi 0, %s254
      %s257 = sphi 0, %s256
      %s271 = sphi 0, %s257
      %s277 = sphi 0, %s279
      %s280 = sphi 0, %s277
      %s281 = sphi 0, %s280
      %s297 = sphi 0, %s281
    $region4: #{tpu_custom_call.1} parent=1 // loop_header_branch
      %34 = sbr.rel (%p32) target = $region8
    $region5: #{tpu_custom_call.1} parent=1 // loop_body
      %s36 = ssub.s32 %s31, 1
      %s37 = ssub.s32 %s31, 2
      %s44 = sadd.s32 1, %s39
      %p45 = scmp.ge.s32.totalorder %s44, 2
      %s46 = scalar_select %p45, 0, %s44
      %s47 = sadd.s32 1, %s38
      %s48 = scalar_select %p45, %s47, %s38
      %p49 = scmp.ge.s32.totalorder %s48, 2
      %s50 = scalar_select %p49, 0, %s48
      %s51 = ssub.s32 %s38, %s50
      %p52 = scmp.eq.s32.totalorder %s51, 0
      %s54 = sadd.s32 %s53, 1
      %s55 = scalar_select %p52, %s53, %s54
      %p58 = pneg %p52
      %p59 = scmp.eq.s32.totalorder %s31, 3
      %p60 = por %p58, %p59
      %p61 = scmp.ne.s32.totalorder %s53, %s56
      %p62 = scmp.eq.s32.totalorder %s31, 0
      %p63 = por %p61, %p62
      %p64 = scmp.ne.s32.totalorder %s53, %s56
      %p65 = scmp.eq.s32.totalorder %s36, 3
      %p66 = por %p64, %p65
      %p67 = scmp.ne.s32.totalorder %s56, %s57
      %p68 = scmp.eq.s32.totalorder %s36, 0
      %p69 = por %p67, %p68
      %p70 = scmp.ne.s32.totalorder %s56, %s57
      %p71 = scmp.eq.s32.totalorder %s37, 3
      %p72 = por %p70, %p71
      %p74 = scmp.ne.s32.totalorder %s57, %s73
      %p75 = scmp.eq.s32.totalorder %s37, 0
      %p76 = por %p74, %p75
      %s77 = ssub.s32 %s39, %s46
      %p78 = scmp.eq.s32.totalorder %s77, 0
      %s80 = sadd.s32 %s79, 1
      %s81 = scalar_select %p78, %s79, %s80
      %p84 = pneg %p78
      %p85 = scmp.eq.s32.totalorder %s31, 3
      %p86 = por %p84, %p85
      %p87 = scmp.ne.s32.totalorder %s79, %s82
      %p88 = scmp.eq.s32.totalorder %s31, 0
      %p89 = por %p87, %p88
      %p90 = scmp.ne.s32.totalorder %s79, %s82
      %p91 = scmp.eq.s32.totalorder %s36, 3
      %p92 = por %p90, %p91
      %p93 = scmp.ne.s32.totalorder %s82, %s83
      %p94 = scmp.eq.s32.totalorder %s36, 0
      %p95 = por %p93, %p94
      %p96 = scmp.ne.s32.totalorder %s82, %s83
      %p97 = scmp.eq.s32.totalorder %s37, 3
      %p98 = por %p96, %p97
      %p100 = scmp.ne.s32.totalorder %s83, %s99
      %p101 = scmp.eq.s32.totalorder %s37, 0
      %p102 = por %p100, %p101
      %s103 = ssub.s32 %s39, %s46
      %p104 = scmp.eq.s32.totalorder %s103, 0
      %s106 = sadd.s32 %s105, 1
      %s107 = scalar_select %p104, %s105, %s106
      %p110 = pneg %p104
      %p111 = scmp.eq.s32.totalorder %s31, 3
      %p112 = por %p110, %p111
      %p113 = scmp.ne.s32.totalorder %s105, %s108
      %p114 = scmp.eq.s32.totalorder %s31, 0
      %p115 = por %p113, %p114
      %p116 = scmp.ne.s32.totalorder %s105, %s108
      %p117 = scmp.eq.s32.totalorder %s36, 3
      %p118 = por %p116, %p117
      %p119 = scmp.ne.s32.totalorder %s108, %s109
      %p120 = scmp.eq.s32.totalorder %s36, 0
      %p121 = por %p119, %p120
      %p122 = scmp.ne.s32.totalorder %s108, %s109
      %p123 = scmp.eq.s32.totalorder %s37, 3
      %p124 = por %p122, %p123
      %p126 = scmp.ne.s32.totalorder %s109, %s125
      %p127 = scmp.eq.s32.totalorder %s37, 0
      %p128 = por %p126, %p127
      %s129 = ssub.s32 %s39, %s46
      %p130 = scmp.eq.s32.totalorder %s129, 0
      %s132 = sadd.s32 %s131, 1
      %s133 = scalar_select %p130, %s131, %s132
      %p136 = pneg %p130
      %p137 = scmp.eq.s32.totalorder %s31, 3
      %p138 = por %p136, %p137
      %p139 = scmp.ne.s32.totalorder %s131, %s134
      %p140 = scmp.eq.s32.totalorder %s31, 0
      %p141 = por %p139, %p140
      %p142 = scmp.ne.s32.totalorder %s131, %s134
      %p143 = scmp.eq.s32.totalorder %s36, 3
      %p144 = por %p142, %p143
      %p145 = scmp.ne.s32.totalorder %s134, %s135
      %p146 = scmp.eq.s32.totalorder %s36, 0
      %p147 = por %p145, %p146
      %p148 = scmp.ne.s32.totalorder %s134, %s135
      %p149 = scmp.eq.s32.totalorder %s37, 3
      %p150 = por %p148, %p149
      %p152 = scmp.ne.s32.totalorder %s135, %s151
      %p153 = scmp.eq.s32.totalorder %s37, 0
      %p154 = por %p152, %p153
      %s155 = ssub.s32 %s39, %s46
      %p156 = scmp.eq.s32.totalorder %s155, 0
      %s158 = sadd.s32 %s157, 1
      %s159 = scalar_select %p156, %s157, %s158
      %p162 = pneg %p156
      %p163 = scmp.eq.s32.totalorder %s31, 3
      %p164 = por %p162, %p163
      %p165 = scmp.ne.s32.totalorder %s157, %s160
      %p166 = scmp.eq.s32.totalorder %s31, 0
      %p167 = por %p165, %p166
      %p168 = scmp.ne.s32.totalorder %s157, %s160
      %p169 = scmp.eq.s32.totalorder %s36, 3
      %p170 = por %p168, %p169
      %p171 = scmp.ne.s32.totalorder %s160, %s161
      %p172 = scmp.eq.s32.totalorder %s36, 0
      %p173 = por %p171, %p172
      %p174 = scmp.ne.s32.totalorder %s160, %s161
      %p175 = scmp.eq.s32.totalorder %s37, 3
      %p176 = por %p174, %p175
      %p178 = scmp.ne.s32.totalorder %s161, %s177
      %p179 = scmp.eq.s32.totalorder %s37, 0
      %p180 = por %p178, %p179
      %s181 = ssub.s32 %s39, %s46
      %p182 = scmp.eq.s32.totalorder %s181, 0
      %s184 = sadd.s32 %s183, 1
      %s185 = scalar_select %p182, %s183, %s184
      %p188 = pneg %p182
      %p189 = scmp.eq.s32.totalorder %s31, 3
      %p190 = por %p188, %p189
      %p191 = scmp.ne.s32.totalorder %s183, %s186
      %p192 = scmp.eq.s32.totalorder %s31, 0
      %p193 = por %p191, %p192
      %p194 = scmp.ne.s32.totalorder %s183, %s186
      %p195 = scmp.eq.s32.totalorder %s36, 3
      %p196 = por %p194, %p195
      %p197 = scmp.ne.s32.totalorder %s186, %s187
      %p198 = scmp.eq.s32.totalorder %s36, 0
      %p199 = por %p197, %p198
      %p200 = scmp.ne.s32.totalorder %s186, %s187
      %p201 = scmp.eq.s32.totalorder %s37, 3
      %p202 = por %p200, %p201
      %p204 = scmp.ne.s32.totalorder %s187, %s203
      %p205 = scmp.eq.s32.totalorder %s37, 0
      %p206 = por %p204, %p205
      %s207 = ssub.s32 %s39, %s46
      %p208 = scmp.eq.s32.totalorder %s207, 0
      %s210 = sadd.s32 %s209, 1
      %s211 = scalar_select %p208, %s209, %s210
      %p214 = pneg %p208
      %p215 = scmp.eq.s32.totalorder %s31, 3
      %p216 = por %p214, %p215
      %p217 = scmp.ne.s32.totalorder %s209, %s212
      %p218 = scmp.eq.s32.totalorder %s31, 0
      %p219 = por %p217, %p218
      %p220 = scmp.ne.s32.totalorder %s209, %s212
      %p221 = scmp.eq.s32.totalorder %s36, 3
      %p222 = por %p220, %p221
      %p223 = scmp.ne.s32.totalorder %s212, %s213
      %p224 = scmp.eq.s32.totalorder %s36, 0
      %p225 = por %p223, %p224
      %p226 = scmp.ne.s32.totalorder %s212, %s213
      %p227 = scmp.eq.s32.totalorder %s37, 3
      %p228 = por %p226, %p227
      %p230 = scmp.ne.s32.totalorder %s213, %s229
      %p231 = scmp.eq.s32.totalorder %s37, 0
      %p232 = por %p230, %p231
      %s234 = sadd.s32 %s233, 1
      %p237 = scmp.eq.s32.totalorder %s31, 3
      %p238 = scmp.ne.s32.totalorder %s233, %s235
      %p239 = scmp.eq.s32.totalorder %s31, 0
      %p240 = por %p238, %p239
      %p241 = scmp.ne.s32.totalorder %s233, %s235
      %p242 = scmp.eq.s32.totalorder %s36, 3
      %p243 = por %p241, %p242
      %p244 = scmp.ne.s32.totalorder %s235, %s236
      %p245 = scmp.eq.s32.totalorder %s36, 0
      %p246 = por %p244, %p245
      %p247 = scmp.ne.s32.totalorder %s235, %s236
      %p248 = scmp.eq.s32.totalorder %s37, 3
      %p249 = por %p247, %p248
      %p251 = scmp.ne.s32.totalorder %s236, %s250
      %p252 = scmp.eq.s32.totalorder %s37, 0
      %p253 = por %p251, %p252
      %s255 = sadd.s32 %s254, 1
      %p258 = scmp.eq.s32.totalorder %s31, 3
      %p259 = scmp.ne.s32.totalorder %s254, %s256
      %p260 = scmp.eq.s32.totalorder %s31, 0
      %p261 = por %p259, %p260
      %p262 = scmp.ne.s32.totalorder %s254, %s256
      %p263 = scmp.eq.s32.totalorder %s36, 3
      %p264 = por %p262, %p263
      %p265 = scmp.ne.s32.totalorder %s256, %s257
      %p266 = scmp.eq.s32.totalorder %s36, 0
      %p267 = por %p265, %p266
      %p268 = scmp.ne.s32.totalorder %s256, %s257
      %p269 = scmp.eq.s32.totalorder %s37, 3
      %p270 = por %p268, %p269
      %p272 = scmp.ne.s32.totalorder %s257, %s271
      %p273 = scmp.eq.s32.totalorder %s37, 0
      %p274 = por %p272, %p273
      %s275 = ssub.s32 %s38, %s50
      %p276 = scmp.eq.s32.totalorder %s275, 0
      %s278 = sadd.s32 %s277, 1
      %s279 = scalar_select %p276, %s277, %s278
      %p282 = pneg %p276
      %p283 = scmp.eq.s32.totalorder %s31, 3
      %p284 = por %p282, %p283
      %p285 = scmp.ne.s32.totalorder %s277, %s280
      %p286 = scmp.eq.s32.totalorder %s31, 0
      %p287 = por %p285, %p286
      %p288 = scmp.ne.s32.totalorder %s277, %s280
      %p289 = scmp.eq.s32.totalorder %s36, 3
      %p290 = por %p288, %p289
      %p291 = scmp.ne.s32.totalorder %s280, %s281
      %p292 = scmp.eq.s32.totalorder %s36, 0
      %p293 = por %p291, %p292
      %p294 = scmp.ne.s32.totalorder %s280, %s281
      %p295 = scmp.eq.s32.totalorder %s37, 3
      %p296 = por %p294, %p295
      %p298 = scmp.ne.s32.totalorder %s281, %s297
      %p299 = scmp.eq.s32.totalorder %s37, 0
      %p300 = por %p298, %p299
      %p301 = scmp.le.s32.totalorder 1, %s31
      %p302 = scmp.lt.s32.totalorder %s31, 5
      %p303 = pnand %p301, %p302
      %p304 = pneg %p303
      // Predicated region
      $region9: #{tpu_custom_call.1} parent=5 // pred_check
        _
      $region10: #{tpu_custom_call.1} parent=5 // pred_check_branch
        %306 = sbr.rel (%p303) target = $region12
      $region11: #{tpu_custom_call.1} parent=5 // pred_region
        %s307 = ssub.s32 %s31, 1
        // Predicated region
        $region13: #{tpu_custom_call.1} parent=11 // pred_check
          %p308 = pneg %p246
        $region14: #{tpu_custom_call.1} parent=11 // pred_check_branch
          %310 = sbr.rel (%p308) target = $region16
        $region15: #{tpu_custom_call.1} parent=11 // pred_region
          %s312 = ssub.s32 32, 32
          %313 = vsyncadd [#allocation16], %s312
          %s315 = sshll.u32 [#allocation15], 4
          %s316 = int_to_ptr.vmem [resolvable:$true] %s315
          %318 = dma.hbm_to_vmem [thread:$0]  %s7, 32, %s316, [#allocation16]
        $region16: #{tpu_custom_call.1} parent=11 // pred_fallthru
          _
        // Predicated region
        $region17: #{tpu_custom_call.1} parent=11 // pred_check
          %p319 = pneg %p267
        $region18: #{tpu_custom_call.1} parent=11 // pred_check_branch
          %321 = sbr.rel (%p319) target = $region20
        $region19: #{tpu_custom_call.1} parent=11 // pred_region
          %s323 = ssub.s32 64, 64
          %324 = vsyncadd [#allocation16], %s323
          %s326 = sshll.u32 [#allocation17], 4
          %s327 = int_to_ptr.vmem [resolvable:$true] %s326
          %329 = dma.hbm_to_vmem [thread:$0]  %s8, 64, %s327, [#allocation16]
        $region20: #{tpu_custom_call.1} parent=11 // pred_fallthru
          _
      $region12: #{tpu_custom_call.1} parent=5 // pred_fallthru
        _
      %p330 = scmp.lt.s32.totalorder %s31, 4
      // Predicated region
      $region21: #{tpu_custom_call.1} parent=5 // pred_check
        %p331 = pneg %p330
      $region22: #{tpu_custom_call.1} parent=5 // pred_check_branch
        %333 = sbr.rel (%p331) target = $region24
      $region23: #{tpu_custom_call.1} parent=5 // pred_region
        // Predicated region
        $region25: #{tpu_custom_call.1} parent=23 // pred_check
          %p334 = pneg %p63
        $region26: #{tpu_custom_call.1} parent=23 // pred_check_branch
          %336 = sbr.rel (%p334) target = $region28
        $region27: #{tpu_custom_call.1} parent=23 // pred_region
          %s337 = sand.u32 %s53, 1
          %s338 = scalar_lea.sflag [#allocation4], %s337
          %s339 = sand.u32 %s53, 1
          %s340 = smul.addr %s339, 16
          %s341 = scalar_lea.vmem [#allocation3], %s340
          %s342 = smul.u32 2, %s38
          %s344 = ssub.s32 256, 256
          %345 = vsyncadd %s338, %s344
          %s346 = smul.addr %s342, 128
          %s347 = scalar_lea.hbm %s0, %s346
          %s349 = sshll.u32 %s341, 4
          %s350 = int_to_ptr.vmem [resolvable:$true] %s349
          %352 = dma.hbm_to_vmem [thread:$0]  %s347, 256, %s350, %s338
        $region28: #{tpu_custom_call.1} parent=23 // pred_fallthru
          _
        // Predicated region
        $region29: #{tpu_custom_call.1} parent=23 // pred_check
          %p353 = pneg %p89
        $region30: #{tpu_custom_call.1} parent=23 // pred_check_branch
          %355 = sbr.rel (%p353) target = $region32
        $region31: #{tpu_custom_call.1} parent=23 // pred_region
          %s356 = sand.u32 %s31, 1
          %s357 = scalar_lea.sflag [#allocation7], %s356
          %s358 = sand.u32 %s79, 1
          %s359 = smul.addr %s358, 8
          %s360 = scalar_lea.vmem [#allocation6], %s359
          %s362 = ssub.s32 128, 128
          %363 = vsyncadd %s357, %s362
          %s364 = smul.addr %s39, 2
          %s365 = smul.addr %s364, 64
          %s366 = scalar_lea.hbm %s1, %s365
          %s367 = sshll.u32 %s360, 4
          %s368 = int_to_ptr.vmem [resolvable:$true] %s367
          %373 = dma.hbm_to_vmem [thread:$0]  %s366, 128, %s368, %s357, 64, 64, 4
        $region32: #{tpu_custom_call.1} parent=23 // pred_fallthru
          _
        // Predicated region
        $region33: #{tpu_custom_call.1} parent=23 // pred_check
          %p374 = pneg %p115
        $region34: #{tpu_custom_call.1} parent=23 // pred_check_branch
          %376 = sbr.rel (%p374) target = $region36
        $region35: #{tpu_custom_call.1} parent=23 // pred_region
          %s377 = sand.u32 %s31, 1
          %s378 = scalar_lea.sflag [#allocation7], %s377
          %s379 = sand.u32 %s105, 1
          %s380 = smul.addr %s379, 8
          %s381 = scalar_lea.vmem [#allocation8], %s380
          %s383 = ssub.s32 128, 128
          %384 = vsyncadd %s378, %s383
          %s385 = smul.addr %s39, 2
          %s386 = smul.addr %s385, 64
          %s387 = scalar_lea.hbm %s2, %s386
          %s388 = sshll.u32 %s381, 4
          %s389 = int_to_ptr.vmem [resolvable:$true] %s388
          %394 = dma.hbm_to_vmem [thread:$0]  %s387, 128, %s389, %s378, 64, 64, 4
        $region36: #{tpu_custom_call.1} parent=23 // pred_fallthru
          _
        // Predicated region
        $region37: #{tpu_custom_call.1} parent=23 // pred_check
          %p395 = pneg %p141
        $region38: #{tpu_custom_call.1} parent=23 // pred_check_branch
          %397 = sbr.rel (%p395) target = $region40
        $region39: #{tpu_custom_call.1} parent=23 // pred_region
          %s398 = sand.u32 %s31, 1
          %s399 = scalar_lea.sflag [#allocation10], %s398
          %s400 = sand.u32 %s131, 1
          %s401 = smul.addr %s400, 8
          %s402 = scalar_lea.vmem [#allocation9], %s401
          %s404 = ssub.s32 128, 128
          %405 = vsyncadd %s399, %s404
          %s406 = smul.addr %s39, 2
          %s407 = smul.addr %s406, 64
          %s408 = scalar_lea.hbm %s3, %s407
          %s409 = sshll.u32 %s402, 4
          %s410 = int_to_ptr.vmem [resolvable:$true] %s409
          %415 = dma.hbm_to_vmem [thread:$0]  %s408, 128, %s410, %s399, 64, 64, 4
        $region40: #{tpu_custom_call.1} parent=23 // pred_fallthru
          _
        // Predicated region
        $region41: #{tpu_custom_call.1} parent=23 // pred_check
          %p416 = pneg %p167
        $region42: #{tpu_custom_call.1} parent=23 // pred_check_branch
          %418 = sbr.rel (%p416) target = $region44
        $region43: #{tpu_custom_call.1} parent=23 // pred_region
          %s419 = sand.u32 %s31, 1
          %s420 = scalar_lea.sflag [#allocation10], %s419
          %s421 = sand.u32 %s157, 1
          %s422 = smul.addr %s421, 4
          %s423 = scalar_lea.vmem [#allocation11], %s422
          %s425 = ssub.s32 64, 64
          %426 = vsyncadd %s420, %s425
          %s427 = smul.addr %s39, 64
          %s428 = scalar_lea.hbm %s4, %s427
          %s430 = sshll.u32 %s423, 4
          %s431 = int_to_ptr.vmem [resolvable:$true] %s430
          %433 = dma.hbm_to_vmem [thread:$0]  %s428, 64, %s431, %s420
        $region44: #{tpu_custom_call.1} parent=23 // pred_fallthru
          _
        // Predicated region
        $region45: #{tpu_custom_call.1} parent=23 // pred_check
          %p434 = pneg %p193
        $region46: #{tpu_custom_call.1} parent=23 // pred_check_branch
          %436 = sbr.rel (%p434) target = $region48
        $region47: #{tpu_custom_call.1} parent=23 // pred_region
          %s437 = sand.u32 %s31, 1
          %s438 = scalar_lea.sflag [#allocation13], %s437
          %s439 = sand.u32 %s183, 1
          %s440 = smul.addr %s439, 4
          %s441 = scalar_lea.vmem [#allocation12], %s440
          %s443 = ssub.s32 64, 64
          %444 = vsyncadd %s438, %s443
          %s445 = smul.addr %s39, 64
          %s446 = scalar_lea.hbm %s5, %s445
          %s448 = sshll.u32 %s441, 4
          %s449 = int_to_ptr.vmem [resolvable:$true] %s448
          %451 = dma.hbm_to_vmem [thread:$0]  %s446, 64, %s449, %s438
        $region48: #{tpu_custom_call.1} parent=23 // pred_fallthru
          _
        // Predicated region
        $region49: #{tpu_custom_call.1} parent=23 // pred_check
          %p452 = pneg %p219
        $region50: #{tpu_custom_call.1} parent=23 // pred_check_branch
          %454 = sbr.rel (%p452) target = $region52
        $region51: #{tpu_custom_call.1} parent=23 // pred_region
          %s455 = sand.u32 %s31, 1
          %s456 = scalar_lea.sflag [#allocation13], %s455
          %s457 = sand.u32 %s209, 1
          %s458 = smul.addr %s457, 8
          %s459 = scalar_lea.vmem [#allocation14], %s458
          %s461 = ssub.s32 128, 128
          %462 = vsyncadd %s456, %s461
          %s463 = smul.addr %s39, 128
          %s464 = scalar_lea.hbm %s6, %s463
          %s466 = sshll.u32 %s459, 4
          %s467 = int_to_ptr.vmem [resolvable:$true] %s466
          %469 = dma.hbm_to_vmem [thread:$0]  %s464, 128, %s467, %s456
        $region52: #{tpu_custom_call.1} parent=23 // pred_fallthru
          _
      $region24: #{tpu_custom_call.1} parent=5 // pred_fallthru
        _
      %p470 = scmp.le.s32.totalorder 1, %s31
      %p471 = scmp.lt.s32.totalorder %s31, 5
      %p472 = pnand %p470, %p471
      %p473 = pneg %p472
      // Predicated region
      $region53: #{tpu_custom_call.1} parent=5 // pred_check
        _
      $region54: #{tpu_custom_call.1} parent=5 // pred_check_branch
        %475 = sbr.rel (%p472) target = $region56
      $region55: #{tpu_custom_call.1} parent=5 // pred_region
        %s476 = ssub.s32 %s31, 1
        %s477 = sand.u32 %s56, 1
        %s478 = scalar_lea.sflag [#allocation4], %s477
        %s479 = sand.u32 %s56, 1
        %s480 = smul.addr %s479, 16
        %s481 = scalar_lea.vmem [#allocation3], %s480
        // Predicated region
        $region57: #{tpu_custom_call.1} parent=55 // pred_check
          %p482 = pneg %p69
        $region58: #{tpu_custom_call.1} parent=55 // pred_check_branch
          %484 = sbr.rel (%p482) target = $region60
        $region59: #{tpu_custom_call.1} parent=55 // pred_region
          %485 = dma.done %s478, 256
        $region60: #{tpu_custom_call.1} parent=55 // pred_fallthru
          _
        %s486 = sand.u32 %s36, 1
        %s487 = scalar_lea.sflag [#allocation7], %s486
        %s488 = sand.u32 %s82, 1
        %s489 = smul.addr %s488, 8
        %s490 = scalar_lea.vmem [#allocation6], %s489
        // Predicated region
        $region61: #{tpu_custom_call.1} parent=55 // pred_check
          %p491 = pneg %p95
        $region62: #{tpu_custom_call.1} parent=55 // pred_check_branch
          %493 = sbr.rel (%p491) target = $region64
        $region63: #{tpu_custom_call.1} parent=55 // pred_region
          %494 = dma.done %s487, 128
        $region64: #{tpu_custom_call.1} parent=55 // pred_fallthru
          _
        %s495 = sand.u32 %s36, 1
        %s496 = scalar_lea.sflag [#allocation7], %s495
        %s497 = sand.u32 %s108, 1
        %s498 = smul.addr %s497, 8
        %s499 = scalar_lea.vmem [#allocation8], %s498
        // Predicated region
        $region65: #{tpu_custom_call.1} parent=55 // pred_check
          %p500 = pneg %p121
        $region66: #{tpu_custom_call.1} parent=55 // pred_check_branch
          %502 = sbr.rel (%p500) target = $region68
        $region67: #{tpu_custom_call.1} parent=55 // pred_region
          %503 = dma.done %s496, 128
        $region68: #{tpu_custom_call.1} parent=55 // pred_fallthru
          _
        %s504 = sand.u32 %s36, 1
        %s505 = scalar_lea.sflag [#allocation10], %s504
        %s506 = sand.u32 %s134, 1
        %s507 = smul.addr %s506, 8
        %s508 = scalar_lea.vmem [#allocation9], %s507
        // Predicated region
        $region69: #{tpu_custom_call.1} parent=55 // pred_check
          %p509 = pneg %p147
        $region70: #{tpu_custom_call.1} parent=55 // pred_check_branch
          %511 = sbr.rel (%p509) target = $region72
        $region71: #{tpu_custom_call.1} parent=55 // pred_region
          %512 = dma.done %s505, 128
        $region72: #{tpu_custom_call.1} parent=55 // pred_fallthru
          _
        %s513 = sand.u32 %s36, 1
        %s514 = scalar_lea.sflag [#allocation10], %s513
        %s515 = sand.u32 %s160, 1
        %s516 = smul.addr %s515, 4
        %s517 = scalar_lea.vmem [#allocation11], %s516
        // Predicated region
        $region73: #{tpu_custom_call.1} parent=55 // pred_check
          %p518 = pneg %p173
        $region74: #{tpu_custom_call.1} parent=55 // pred_check_branch
          %520 = sbr.rel (%p518) target = $region76
        $region75: #{tpu_custom_call.1} parent=55 // pred_region
          %521 = dma.done %s514, 64
        $region76: #{tpu_custom_call.1} parent=55 // pred_fallthru
          _
        %s522 = sand.u32 %s36, 1
        %s523 = scalar_lea.sflag [#allocation13], %s522
        %s524 = sand.u32 %s186, 1
        %s525 = smul.addr %s524, 4
        %s526 = scalar_lea.vmem [#allocation12], %s525
        // Predicated region
        $region77: #{tpu_custom_call.1} parent=55 // pred_check
          %p527 = pneg %p199
        $region78: #{tpu_custom_call.1} parent=55 // pred_check_branch
          %529 = sbr.rel (%p527) target = $region80
        $region79: #{tpu_custom_call.1} parent=55 // pred_region
          %530 = dma.done %s523, 64
        $region80: #{tpu_custom_call.1} parent=55 // pred_fallthru
          _
        %s531 = sand.u32 %s36, 1
        %s532 = scalar_lea.sflag [#allocation13], %s531
        %s533 = sand.u32 %s212, 1
        %s534 = smul.addr %s533, 8
        %s535 = scalar_lea.vmem [#allocation14], %s534
        // Predicated region
        $region81: #{tpu_custom_call.1} parent=55 // pred_check
          %p536 = pneg %p225
        $region82: #{tpu_custom_call.1} parent=55 // pred_check_branch
          %538 = sbr.rel (%p536) target = $region84
        $region83: #{tpu_custom_call.1} parent=55 // pred_region
          %539 = dma.done %s532, 128
        $region84: #{tpu_custom_call.1} parent=55 // pred_fallthru
          _
        // Predicated region
        $region85: #{tpu_custom_call.1} parent=55 // pred_check
          %p540 = pneg %p246
        $region86: #{tpu_custom_call.1} parent=55 // pred_check_branch
          %542 = sbr.rel (%p540) target = $region88
        $region87: #{tpu_custom_call.1} parent=55 // pred_region
          %543 = dma.done [#allocation16], 32
        $region88: #{tpu_custom_call.1} parent=55 // pred_fallthru
          _
        // Predicated region
        $region89: #{tpu_custom_call.1} parent=55 // pred_check
          %p544 = pneg %p267
        $region90: #{tpu_custom_call.1} parent=55 // pred_check_branch
          %546 = sbr.rel (%p544) target = $region92
        $region91: #{tpu_custom_call.1} parent=55 // pred_region
          %547 = dma.done [#allocation16], 64
        $region92: #{tpu_custom_call.1} parent=55 // pred_fallthru
          _
        %s548 = sand.u32 %s56, 1
        %s549 = scalar_lea.sflag [#allocation4], %s548
        %s550 = sand.u32 %s56, 1
        %s551 = smul.addr %s550, 16
        %s552 = scalar_lea.vmem [#allocation3], %s551
        %p553 = pneg %p69
        %p554 = pneg %p66
        %s555 = sand.u32 %s36, 1
        %s556 = scalar_lea.sflag [#allocation7], %s555
        %s557 = sand.u32 %s82, 1
        %s558 = smul.addr %s557, 8
        %s559 = scalar_lea.vmem [#allocation6], %s558
        %p560 = pneg %p95
        %p561 = pneg %p92
        %s562 = sand.u32 %s36, 1
        %s563 = scalar_lea.sflag [#allocation7], %s562
        %s564 = sand.u32 %s108, 1
        %s565 = smul.addr %s564, 8
        %s566 = scalar_lea.vmem [#allocation8], %s565
        %p567 = pneg %p121
        %p568 = pneg %p118
        %s569 = sand.u32 %s36, 1
        %s570 = scalar_lea.sflag [#allocation10], %s569
        %s571 = sand.u32 %s134, 1
        %s572 = smul.addr %s571, 8
        %s573 = scalar_lea.vmem [#allocation9], %s572
        %p574 = pneg %p147
        %p575 = pneg %p144
        %s576 = sand.u32 %s36, 1
        %s577 = scalar_lea.sflag [#allocation10], %s576
        %s578 = sand.u32 %s160, 1
        %s579 = smul.addr %s578, 4
        %s580 = scalar_lea.vmem [#allocation11], %s579
        %p581 = pneg %p173
        %p582 = pneg %p170
        %s583 = sand.u32 %s36, 1
        %s584 = scalar_lea.sflag [#allocation13], %s583
        %s585 = sand.u32 %s186, 1
        %s586 = smul.addr %s585, 4
        %s587 = scalar_lea.vmem [#allocation12], %s586
        %p588 = pneg %p199
        %p589 = pneg %p196
        %s590 = sand.u32 %s36, 1
        %s591 = scalar_lea.sflag [#allocation13], %s590
        %s592 = sand.u32 %s212, 1
        %s593 = smul.addr %s592, 8
        %s594 = scalar_lea.vmem [#allocation14], %s593
        %p595 = pneg %p225
        %p596 = pneg %p222
        %p597 = pneg %p246
        %p598 = pneg %p243
        %p599 = pneg %p267
        %p600 = pneg %p264
        %p601 = pneg %p293
        %p602 = pneg %p290
        %s603 = sand.u32 %s280, 1
        %s604 = scalar_lea.sflag [#allocation5], %s603
        %s605 = sand.u32 %s280, 1
        %s606 = smul.addr %s605, 8
        %s607 = scalar_lea.vmem [#allocation18], %s606
        %s608 = smul.u32 2, %s40
        %s609 = smul.u32 2, %s40
        %p611 = scmp.eq.s32.totalorder %s41, 0
        // Predicated region
        $region93: #{tpu_custom_call.1} parent=55 // pred_check
          %p612 = pneg %p611
        $region94: #{tpu_custom_call.1} parent=55 // pred_check_branch
          %614 = sbr.rel (%p612) target = $region96
        $region95: #{tpu_custom_call.1} parent=55 // pred_region
          %v615 = vld [vmem:[%s481] sm:$0xff]
          %v616 = vld [vmem:[%s481 + $0x8] sm:$0xff]
          %617 = vst [vmem:[#allocation2] sm:$0xff] %v615
          %618 = vst [vmem:[#allocation2 + $0x8] sm:$0xff] %v616
        $region96: #{tpu_custom_call.1} parent=55 // pred_fallthru
          _
        %v619 = vld [vmem:[#allocation2] sm:$0xff]
        %v620 = vld [vmem:[#allocation2 + $0x8] sm:$0xff]
        %v621 = vpack.c.bf16 %v619, %v619
        %v622 = vpack.c.bf16 %v620, %v620
        %v623 = vld [vmem:[%s490] sm:$0xf]
        %v624 = vld [vmem:[%s490 + $0x4] sm:$0xf]
        %v625 = vld [vmem:[%s499 + $0x4] sm:$0xf]
        %v626 = vld [vmem:[%s508 + $0x4] sm:$0xf]
        %v627 = vld [vmem:[%s517] sm:$0xf]
        %v628 = vld [vmem:[%s526] sm:$0xf]
        %v629 = vld [vmem:[%s535] sm:$0xff]
        %v632 = vunpack.c.l.b16 %v623
        %v633 = vunpack.c.l.b16 %v624
        %v634 = vpack.c.b16 %v633, %v632
        %vm635 = vcmask 64512
        %v637 = vsel %vm635, %v634, 0
        %vm639 = vcmask 1043456
        %v641 = vsel %vm639, %v621, 0
        %v644 = vsel %vm639, %v622, 0
        %646 = vmatprep.subr.bf16.mxu0 %v644
        %647 = vmatpush1.bf16.msra.mxu0 %v641
        %648 = vmatprep.subr.bf16.mxu0 0
        %649 = vmatpush1.bf16.msra.mxu0 0
        %650 = vmatprep.subr.bf16.mxu0 0
        %651 = vmatpush1.bf16.msra.mxu0 0
        %652 = vmatprep.subr.bf16.mxu0 0
        %653 = vmatpush1.bf16.msra.mxu0 0
        %654 = vmatprep.subr.bf16.mxu0 0
        %655 = vmatpush1.bf16.msra.mxu0 0
        %656 = vmatprep.subr.bf16.mxu0 0
        %657 = vmatpush1.bf16.msra.mxu0 0
        %658 = vmatprep.subr.bf16.mxu0 0
        %659 = vmatpush1.bf16.msra.mxu0 0
        %660 = vmatprep.subr.bf16.mxu0 0
        %661 = vmatpush1.bf16.msra.mxu0 0
        %662 = vmatprep.subr.bf16.mxu0 0
        %663 = vmatpush1.bf16.msra.mxu0 0
        %664 = vmatprep.subr.bf16.mxu0 0
        %665 = vmatpush1.bf16.msra.mxu0 0
        %666 = vmatprep.subr.bf16.mxu0 0
        %667 = vmatpush1.bf16.msra.mxu0 0
        %668 = vmatprep.subr.bf16.mxu0 0
        %669 = vmatpush1.bf16.msra.mxu0 0
        %670 = vmatprep.subr.bf16.mxu0 0
        %671 = vmatpush1.bf16.msra.mxu0 0
        %672 = vmatprep.subr.bf16.mxu0 0
        %673 = vmatpush1.bf16.msra.mxu0 0
        %674 = vmatprep.subr.bf16.mxu0 0
        %675 = vmatpush1.bf16.msra.mxu0 0
        %676 = vmatprep.subr.bf16.mxu0 0
        %677 = vmatpush1.bf16.msra.mxu0 0
        %678 = vmatprep.mubr.bf16.mxu0 0
        %679 = vmatmul.mubr.bf16.gmra.mrb[0].mxu0 %v637
        %v680 = vpop.f32.mrb[0].mxu0
        %v681 = vadd.f32 0.0, %v680
        %v682 = vpop.f32.mrb[0].mxu0
        %v683 = vadd.f32 0.0, %v682
        %v684 = vpop.f32.mrb[0].mxu0
        %v685 = vadd.f32 0.0, %v684
        %v686 = vpop.f32.mrb[0].mxu0
        %v687 = vadd.f32 0.0, %v686
        %688 = vdwg.mxu0
        %690 = vset.pattern.permute.xlu0 0
        %691 = vperm.xlu0 %690, %v629
        %v692 = vpop.permute.xlu0 %691
        %v694 = vadd.f32 %v681, %v692
        %v695 = vadd.f32 %v683, %v692
        %v696 = vmax.f32 %v694, 0.0
        %v697 = vmax.f32 %v695, 0.0
        %698 = vset.pattern.permute.xlu0 2
        %699 = vperm.xlu0 %698, %v629
        %v700 = vpop.permute.xlu0 %699
        %v702 = vadd.f32 %v685, %v700
        %v703 = vadd.f32 %v687, %v700
        %v704 = vmax.f32 %v702, 0.0
        %v705 = vmax.f32 %v703, 0.0
        %v706 = vpack.c.bf16 %v696, %v696
        %v707 = vpack.c.bf16 %v697, %v697
        %v708 = vpack.c.bf16 %v704, %v704
        %v709 = vpack.c.bf16 %v705, %v705
        %710 = vset.pattern.permute.xlu0 1
        %711 = vperm.xlu0 %710, %v629
        %v712 = vpop.permute.xlu0 %711
        %v715 = vsel %vm635, %v625, 0
        %v718 = vsel %vm639, %v706, 0
        %v721 = vsel %vm639, %v707, 0
        %723 = vmatprep.subr.bf16.mxu0 %v721
        %724 = vmatpush1.bf16.msra.mxu0 %v718
        %725 = vmatprep.subr.bf16.mxu0 0
        %726 = vmatpush1.bf16.msra.mxu0 0
        %727 = vmatprep.subr.bf16.mxu0 0
        %728 = vmatpush1.bf16.msra.mxu0 0
        %729 = vmatprep.subr.bf16.mxu0 0
        %730 = vmatpush1.bf16.msra.mxu0 0
        %731 = vmatprep.subr.bf16.mxu0 0
        %732 = vmatpush1.bf16.msra.mxu0 0
        %733 = vmatprep.subr.bf16.mxu0 0
        %734 = vmatpush1.bf16.msra.mxu0 0
        %735 = vmatprep.subr.bf16.mxu0 0
        %736 = vmatpush1.bf16.msra.mxu0 0
        %737 = vmatprep.subr.bf16.mxu0 0
        %738 = vmatpush1.bf16.msra.mxu0 0
        %739 = vmatprep.subr.bf16.mxu0 0
        %740 = vmatpush1.bf16.msra.mxu0 0
        %741 = vmatprep.subr.bf16.mxu0 0
        %742 = vmatpush1.bf16.msra.mxu0 0
        %743 = vmatprep.subr.bf16.mxu0 0
        %744 = vmatpush1.bf16.msra.mxu0 0
        %745 = vmatprep.subr.bf16.mxu0 0
        %746 = vmatpush1.bf16.msra.mxu0 0
        %747 = vmatprep.subr.bf16.mxu0 0
        %748 = vmatpush1.bf16.msra.mxu0 0
        %749 = vmatprep.subr.bf16.mxu0 0
        %750 = vmatpush1.bf16.msra.mxu0 0
        %751 = vmatprep.subr.bf16.mxu0 0
        %752 = vmatpush1.bf16.msra.mxu0 0
        %753 = vmatprep.subr.bf16.mxu0 0
        %754 = vmatpush1.bf16.msra.mxu0 0
        %755 = vmatprep.mubr.bf16.mxu0 0
        %756 = vmatmul.mubr.bf16.gmra.mrb[0].mxu0 %v715
        %v757 = vpop.f32.mrb[0].mxu0
        %v758 = vadd.f32 %v712, %v757
        %v759 = vpop.f32.mrb[0].mxu0
        %v760 = vadd.f32 %v712, %v759
        %v761 = vpop.f32.mrb[0].mxu0
        %v762 = vpop.f32.mrb[0].mxu0
        %763 = vdwg.mxu0
        %v764 = vmax.f32 %v758, 0.0
        %v765 = vmax.f32 %v760, 0.0
        %766 = vset.pattern.permute.xlu0 3
        %767 = vperm.xlu0 %766, %v629
        %v768 = vpop.permute.xlu0 %767
        %v771 = vsel %vm635, %v626, 0
        %v774 = vsel %vm639, %v708, 0
        %v777 = vsel %vm639, %v709, 0
        %779 = vmatprep.subr.bf16.mxu0 %v777
        %780 = vmatpush1.bf16.msra.mxu0 %v774
        %781 = vmatprep.subr.bf16.mxu0 0
        %782 = vmatpush1.bf16.msra.mxu0 0
        %783 = vmatprep.subr.bf16.mxu0 0
        %784 = vmatpush1.bf16.msra.mxu0 0
        %785 = vmatprep.subr.bf16.mxu0 0
        %786 = vmatpush1.bf16.msra.mxu0 0
        %787 = vmatprep.subr.bf16.mxu0 0
        %788 = vmatpush1.bf16.msra.mxu0 0
        %789 = vmatprep.subr.bf16.mxu0 0
        %790 = vmatpush1.bf16.msra.mxu0 0
        %791 = vmatprep.subr.bf16.mxu0 0
        %792 = vmatpush1.bf16.msra.mxu0 0
        %793 = vmatprep.subr.bf16.mxu0 0
        %794 = vmatpush1.bf16.msra.mxu0 0
        %795 = vmatprep.subr.bf16.mxu0 0
        %796 = vmatpush1.bf16.msra.mxu0 0
        %797 = vmatprep.subr.bf16.mxu0 0
        %798 = vmatpush1.bf16.msra.mxu0 0
        %799 = vmatprep.subr.bf16.mxu0 0
        %800 = vmatpush1.bf16.msra.mxu0 0
        %801 = vmatprep.subr.bf16.mxu0 0
        %802 = vmatpush1.bf16.msra.mxu0 0
        %803 = vmatprep.subr.bf16.mxu0 0
        %804 = vmatpush1.bf16.msra.mxu0 0
        %805 = vmatprep.subr.bf16.mxu0 0
        %806 = vmatpush1.bf16.msra.mxu0 0
        %807 = vmatprep.subr.bf16.mxu0 0
        %808 = vmatpush1.bf16.msra.mxu0 0
        %809 = vmatprep.subr.bf16.mxu0 0
        %810 = vmatpush1.bf16.msra.mxu0 0
        %811 = vmatprep.mubr.bf16.mxu0 0
        %812 = vmatmul.mubr.bf16.gmra.mrb[0].mxu0 %v771
        %v813 = vpop.f32.mrb[0].mxu0
        %v814 = vadd.f32 %v768, %v813
        %v815 = vpop.f32.mrb[0].mxu0
        %v816 = vadd.f32 %v768, %v815
        %v817 = vpop.f32.mrb[0].mxu0
        %v818 = vpop.f32.mrb[0].mxu0
        %819 = vdwg.mxu0
        %v820 = vmax.f32 %v814, 0.0
        %v821 = vmax.f32 %v816, 0.0
        %v822 = vpack.c.bf16 %v764, %v764
        %v823 = vpack.c.bf16 %v765, %v765
        %v824 = vpack.c.bf16 %v820, %v820
        %v825 = vpack.c.bf16 %v821, %v821
        %827 = vrot.lane.b32.xlu0 %v822, 112
        %v828 = vpop.permute.xlu0 %827
        %830 = vrot.lane.b32.xlu0 %v822, 96
        %v831 = vpop.permute.xlu0 %830
        %833 = vrot.lane.b32.xlu0 %v822, 80
        %v834 = vpop.permute.xlu0 %833
        %836 = vrot.lane.b32.xlu0 %v822, 64
        %v837 = vpop.permute.xlu0 %836
        %839 = vrot.lane.b32.xlu0 %v822, 48
        %v840 = vpop.permute.xlu0 %839
        %842 = vrot.lane.b32.xlu0 %v822, 32
        %v843 = vpop.permute.xlu0 %842
        %845 = vrot.lane.b32.xlu0 %v822, 16
        %v846 = vpop.permute.xlu0 %845
        %849 = vrot.lane.b32.xlu0 %v823, 112
        %v850 = vpop.permute.xlu0 %849
        %852 = vrot.lane.b32.xlu0 %v823, 96
        %v853 = vpop.permute.xlu0 %852
        %855 = vrot.lane.b32.xlu0 %v823, 80
        %v856 = vpop.permute.xlu0 %855
        %858 = vrot.lane.b32.xlu0 %v823, 64
        %v859 = vpop.permute.xlu0 %858
        %861 = vrot.lane.b32.xlu0 %v823, 48
        %v862 = vpop.permute.xlu0 %861
        %864 = vrot.lane.b32.xlu0 %v823, 32
        %v865 = vpop.permute.xlu0 %864
        %867 = vrot.lane.b32.xlu0 %v823, 16
        %v868 = vpop.permute.xlu0 %867
        %v870 = vcombine.low %v822, %v837
        %v872 = vunpack.c.l.s4 1983009808
        %v873 = vunpack.c.0.s8 %v872
        %v874 = vlaneseq
        %v875 = vshrl.u32 %v874, 7
        %v876 = vsub.s32 %v873, %v875
        %v877 = vrot.slane %v870, %v876
        %v878 = vcombine.low %v831, %v843
        %v880 = vunpack.c.l.s4 1983009808
        %v881 = vunpack.c.0.s8 %v880
        %v882 = vlaneseq
        %v883 = vshrl.u32 %v882, 7
        %v884 = vsub.s32 %v881, %v883
        %v885 = vrot.slane %v878, %v884
        %v886 = vcombine.low %v823, %v859
        %v888 = vunpack.c.l.s4 1983009808
        %v889 = vunpack.c.0.s8 %v888
        %v890 = vlaneseq
        %v891 = vshrl.u32 %v890, 7
        %v892 = vsub.s32 %v889, %v891
        %v893 = vrot.slane %v886, %v892
        %v894 = vcombine.low %v853, %v865
        %v896 = vunpack.c.l.s4 1983009808
        %v897 = vunpack.c.0.s8 %v896
        %v898 = vlaneseq
        %v899 = vshrl.u32 %v898, 7
        %v900 = vsub.s32 %v897, %v899
        %v901 = vrot.slane %v894, %v900
        %v902 = vcombine.low %v877, %v885
        %v903 = vcombine.high %v877, %v885
        %v905 = vunpack.c.l.s4 1934713408
        %v906 = vunpack.c.0.s8 %v905
        %v907 = vlaneseq
        %v908 = vshrl.u32 %v907, 7
        %v909 = vsub.s32 %v906, %v908
        %v910 = vrot.slane %v902, %v909
        %v912 = vunpack.c.l.s4 1934713408
        %v913 = vunpack.c.0.s8 %v912
        %v914 = vlaneseq
        %v915 = vshrl.u32 %v914, 7
        %v916 = vsub.s32 %v913, %v915
        %v917 = vrot.slane %v903, %v916
        %v918 = vcombine.low %v893, %v901
        %v919 = vcombine.high %v893, %v901
        %v921 = vunpack.c.l.s4 1934713408
        %v922 = vunpack.c.0.s8 %v921
        %v923 = vlaneseq
        %v924 = vshrl.u32 %v923, 7
        %v925 = vsub.s32 %v922, %v924
        %v926 = vrot.slane %v918, %v925
        %v928 = vunpack.c.l.s4 1934713408
        %v929 = vunpack.c.0.s8 %v928
        %v930 = vlaneseq
        %v931 = vshrl.u32 %v930, 7
        %v932 = vsub.s32 %v929, %v931
        %v933 = vrot.slane %v919, %v932
        %v934 = vcombine.low %v910, %v926
        %v935 = vcombine.high %v910, %v926
        %v936 = vcombine.low %v917, %v933
        %v937 = vcombine.high %v917, %v933
        %v938 = vcombine.low %v828, %v840
        %v940 = vunpack.c.l.s4 1983009808
        %v941 = vunpack.c.0.s8 %v940
        %v942 = vlaneseq
        %v943 = vshrl.u32 %v942, 7
        %v944 = vsub.s32 %v941, %v943
        %v945 = vrot.slane %v938, %v944
        %v946 = vcombine.low %v834, %v846
        %v948 = vunpack.c.l.s4 1983009808
        %v949 = vunpack.c.0.s8 %v948
        %v950 = vlaneseq
        %v951 = vshrl.u32 %v950, 7
        %v952 = vsub.s32 %v949, %v951
        %v953 = vrot.slane %v946, %v952
        %v954 = vcombine.low %v850, %v862
        %v956 = vunpack.c.l.s4 1983009808
        %v957 = vunpack.c.0.s8 %v956
        %v958 = vlaneseq
        %v959 = vshrl.u32 %v958, 7
        %v960 = vsub.s32 %v957, %v959
        %v961 = vrot.slane %v954, %v960
        %v962 = vcombine.low %v856, %v868
        %v964 = vunpack.c.l.s4 1983009808
        %v965 = vunpack.c.0.s8 %v964
        %v966 = vlaneseq
        %v967 = vshrl.u32 %v966, 7
        %v968 = vsub.s32 %v965, %v967
        %v969 = vrot.slane %v962, %v968
        %v970 = vcombine.low %v945, %v953
        %v971 = vcombine.high %v945, %v953
        %v973 = vunpack.c.l.s4 1934713408
        %v974 = vunpack.c.0.s8 %v973
        %v975 = vlaneseq
        %v976 = vshrl.u32 %v975, 7
        %v977 = vsub.s32 %v974, %v976
        %v978 = vrot.slane %v970, %v977
        %v980 = vunpack.c.l.s4 1934713408
        %v981 = vunpack.c.0.s8 %v980
        %v982 = vlaneseq
        %v983 = vshrl.u32 %v982, 7
        %v984 = vsub.s32 %v981, %v983
        %v985 = vrot.slane %v971, %v984
        %v986 = vcombine.low %v961, %v969
        %v987 = vcombine.high %v961, %v969
        %v989 = vunpack.c.l.s4 1934713408
        %v990 = vunpack.c.0.s8 %v989
        %v991 = vlaneseq
        %v992 = vshrl.u32 %v991, 7
        %v993 = vsub.s32 %v990, %v992
        %v994 = vrot.slane %v986, %v993
        %v996 = vunpack.c.l.s4 1934713408
        %v997 = vunpack.c.0.s8 %v996
        %v998 = vlaneseq
        %v999 = vshrl.u32 %v998, 7
        %v1000 = vsub.s32 %v997, %v999
        %v1001 = vrot.slane %v987, %v1000
        %v1002 = vcombine.low %v978, %v994
        %v1003 = vcombine.high %v978, %v994
        %v1004 = vcombine.low %v985, %v1001
        %v1005 = vcombine.high %v985, %v1001
        %v1008 = vpack.i.b16 %v1002, %v934
        %v1009 = vshrl.u32 %v934, 16
        %v1010 = vshrl.u32 %v1002, 16
        %v1011 = vpack.i.b16 %v1010, %v1009
        %v1014 = vpack.i.b16 %v1003, %v935
        %v1015 = vshrl.u32 %v935, 16
        %v1016 = vshrl.u32 %v1003, 16
        %v1017 = vpack.i.b16 %v1016, %v1015
        %v1020 = vpack.i.b16 %v1004, %v936
        %v1021 = vshrl.u32 %v936, 16
        %v1022 = vshrl.u32 %v1004, 16
        %v1023 = vpack.i.b16 %v1022, %v1021
        %v1026 = vpack.i.b16 %v1005, %v937
        %v1027 = vshrl.u32 %v937, 16
        %v1028 = vshrl.u32 %v1005, 16
        %v1029 = vpack.i.b16 %v1028, %v1027
        %1031 = vrot.lane.b32.xlu0 %v824, 112
        %v1032 = vpop.permute.xlu0 %1031
        %1034 = vrot.lane.b32.xlu0 %v824, 96
        %v1035 = vpop.permute.xlu0 %1034
        %1037 = vrot.lane.b32.xlu0 %v824, 80
        %v1038 = vpop.permute.xlu0 %1037
        %1040 = vrot.lane.b32.xlu0 %v824, 64
        %v1041 = vpop.permute.xlu0 %1040
        %1043 = vrot.lane.b32.xlu0 %v824, 48
        %v1044 = vpop.permute.xlu0 %1043
        %1046 = vrot.lane.b32.xlu0 %v824, 32
        %v1047 = vpop.permute.xlu0 %1046
        %1049 = vrot.lane.b32.xlu0 %v824, 16
        %v1050 = vpop.permute.xlu0 %1049
        %1053 = vrot.lane.b32.xlu0 %v825, 112
        %v1054 = vpop.permute.xlu0 %1053
        %1056 = vrot.lane.b32.xlu0 %v825, 96
        %v1057 = vpop.permute.xlu0 %1056
        %1059 = vrot.lane.b32.xlu0 %v825, 80
        %v1060 = vpop.permute.xlu0 %1059
        %1062 = vrot.lane.b32.xlu0 %v825, 64
        %v1063 = vpop.permute.xlu0 %1062
        %1065 = vrot.lane.b32.xlu0 %v825, 48
        %v1066 = vpop.permute.xlu0 %1065
        %1068 = vrot.lane.b32.xlu0 %v825, 32
        %v1069 = vpop.permute.xlu0 %1068
        %1071 = vrot.lane.b32.xlu0 %v825, 16
        %v1072 = vpop.permute.xlu0 %1071
        %v1074 = vcombine.low %v824, %v1041
        %v1076 = vunpack.c.l.s4 1983009808
        %v1077 = vunpack.c.0.s8 %v1076
        %v1078 = vlaneseq
        %v1079 = vshrl.u32 %v1078, 7
        %v1080 = vsub.s32 %v1077, %v1079
        %v1081 = vrot.slane %v1074, %v1080
        %v1082 = vcombine.low %v1035, %v1047
        %v1084 = vunpack.c.l.s4 1983009808
        %v1085 = vunpack.c.0.s8 %v1084
        %v1086 = vlaneseq
        %v1087 = vshrl.u32 %v1086, 7
        %v1088 = vsub.s32 %v1085, %v1087
        %v1089 = vrot.slane %v1082, %v1088
        %v1090 = vcombine.low %v825, %v1063
        %v1092 = vunpack.c.l.s4 1983009808
        %v1093 = vunpack.c.0.s8 %v1092
        %v1094 = vlaneseq
        %v1095 = vshrl.u32 %v1094, 7
        %v1096 = vsub.s32 %v1093, %v1095
        %v1097 = vrot.slane %v1090, %v1096
        %v1098 = vcombine.low %v1057, %v1069
        %v1100 = vunpack.c.l.s4 1983009808
        %v1101 = vunpack.c.0.s8 %v1100
        %v1102 = vlaneseq
        %v1103 = vshrl.u32 %v1102, 7
        %v1104 = vsub.s32 %v1101, %v1103
        %v1105 = vrot.slane %v1098, %v1104
        %v1106 = vcombine.low %v1081, %v1089
        %v1107 = vcombine.high %v1081, %v1089
        %v1109 = vunpack.c.l.s4 1934713408
        %v1110 = vunpack.c.0.s8 %v1109
        %v1111 = vlaneseq
        %v1112 = vshrl.u32 %v1111, 7
        %v1113 = vsub.s32 %v1110, %v1112
        %v1114 = vrot.slane %v1106, %v1113
        %v1116 = vunpack.c.l.s4 1934713408
        %v1117 = vunpack.c.0.s8 %v1116
        %v1118 = vlaneseq
        %v1119 = vshrl.u32 %v1118, 7
        %v1120 = vsub.s32 %v1117, %v1119
        %v1121 = vrot.slane %v1107, %v1120
        %v1122 = vcombine.low %v1097, %v1105
        %v1123 = vcombine.high %v1097, %v1105
        %v1125 = vunpack.c.l.s4 1934713408
        %v1126 = vunpack.c.0.s8 %v1125
        %v1127 = vlaneseq
        %v1128 = vshrl.u32 %v1127, 7
        %v1129 = vsub.s32 %v1126, %v1128
        %v1130 = vrot.slane %v1122, %v1129
        %v1132 = vunpack.c.l.s4 1934713408
        %v1133 = vunpack.c.0.s8 %v1132
        %v1134 = vlaneseq
        %v1135 = vshrl.u32 %v1134, 7
        %v1136 = vsub.s32 %v1133, %v1135
        %v1137 = vrot.slane %v1123, %v1136
        %v1138 = vcombine.low %v1114, %v1130
        %v1139 = vcombine.high %v1114, %v1130
        %v1140 = vcombine.low %v1121, %v1137
        %v1141 = vcombine.high %v1121, %v1137
        %v1142 = vcombine.low %v1032, %v1044
        %v1144 = vunpack.c.l.s4 1983009808
        %v1145 = vunpack.c.0.s8 %v1144
        %v1146 = vlaneseq
        %v1147 = vshrl.u32 %v1146, 7
        %v1148 = vsub.s32 %v1145, %v1147
        %v1149 = vrot.slane %v1142, %v1148
        %v1150 = vcombine.low %v1038, %v1050
        %v1152 = vunpack.c.l.s4 1983009808
        %v1153 = vunpack.c.0.s8 %v1152
        %v1154 = vlaneseq
        %v1155 = vshrl.u32 %v1154, 7
        %v1156 = vsub.s32 %v1153, %v1155
        %v1157 = vrot.slane %v1150, %v1156
        %v1158 = vcombine.low %v1054, %v1066
        %v1160 = vunpack.c.l.s4 1983009808
        %v1161 = vunpack.c.0.s8 %v1160
        %v1162 = vlaneseq
        %v1163 = vshrl.u32 %v1162, 7
        %v1164 = vsub.s32 %v1161, %v1163
        %v1165 = vrot.slane %v1158, %v1164
        %v1166 = vcombine.low %v1060, %v1072
        %v1168 = vunpack.c.l.s4 1983009808
        %v1169 = vunpack.c.0.s8 %v1168
        %v1170 = vlaneseq
        %v1171 = vshrl.u32 %v1170, 7
        %v1172 = vsub.s32 %v1169, %v1171
        %v1173 = vrot.slane %v1166, %v1172
        %v1174 = vcombine.low %v1149, %v1157
        %v1175 = vcombine.high %v1149, %v1157
        %v1177 = vunpack.c.l.s4 1934713408
        %v1178 = vunpack.c.0.s8 %v1177
        %v1179 = vlaneseq
        %v1180 = vshrl.u32 %v1179, 7
        %v1181 = vsub.s32 %v1178, %v1180
        %v1182 = vrot.slane %v1174, %v1181
        %v1184 = vunpack.c.l.s4 1934713408
        %v1185 = vunpack.c.0.s8 %v1184
        %v1186 = vlaneseq
        %v1187 = vshrl.u32 %v1186, 7
        %v1188 = vsub.s32 %v1185, %v1187
        %v1189 = vrot.slane %v1175, %v1188
        %v1190 = vcombine.low %v1165, %v1173
        %v1191 = vcombine.high %v1165, %v1173
        %v1193 = vunpack.c.l.s4 1934713408
        %v1194 = vunpack.c.0.s8 %v1193
        %v1195 = vlaneseq
        %v1196 = vshrl.u32 %v1195, 7
        %v1197 = vsub.s32 %v1194, %v1196
        %v1198 = vrot.slane %v1190, %v1197
        %v1200 = vunpack.c.l.s4 1934713408
        %v1201 = vunpack.c.0.s8 %v1200
        %v1202 = vlaneseq
        %v1203 = vshrl.u32 %v1202, 7
        %v1204 = vsub.s32 %v1201, %v1203
        %v1205 = vrot.slane %v1191, %v1204
        %v1206 = vcombine.low %v1182, %v1198
        %v1207 = vcombine.high %v1182, %v1198
        %v1208 = vcombine.low %v1189, %v1205
        %v1209 = vcombine.high %v1189, %v1205
        %v1212 = vpack.i.b16 %v1206, %v1138
        %v1214 = vshrl.u32 %v1138, 16
        %v1215 = vshrl.u32 %v1206, 16
        %v1216 = vpack.i.b16 %v1215, %v1214
        %v1220 = vpack.i.b16 %v1207, %v1139
        %v1222 = vshrl.u32 %v1139, 16
        %v1223 = vshrl.u32 %v1207, 16
        %v1224 = vpack.i.b16 %v1223, %v1222
        %v1228 = vpack.i.b16 %v1208, %v1140
        %v1230 = vshrl.u32 %v1140, 16
        %v1231 = vshrl.u32 %v1208, 16
        %v1232 = vpack.i.b16 %v1231, %v1230
        %v1236 = vpack.i.b16 %v1209, %v1141
        %v1238 = vshrl.u32 %v1141, 16
        %v1239 = vshrl.u32 %v1209, 16
        %v1240 = vpack.i.b16 %v1239, %v1238
        %vm1242 = vcmask 130048
        %v1244 = vsel %vm1242, %v1008, 0
        %1246 = vmatprep.subr.bf16.mxu0 0
        %1247 = vmatpush1.bf16.msra.mxu0 %v1212
        %1248 = vmatprep.subr.bf16.mxu0 0
        %1249 = vmatpush1.bf16.msra.mxu0 0
        %1250 = vmatprep.subr.bf16.mxu0 0
        %1251 = vmatpush1.bf16.msra.mxu0 0
        %1252 = vmatprep.subr.bf16.mxu0 0
        %1253 = vmatpush1.bf16.msra.mxu0 0
        %1254 = vmatprep.subr.bf16.mxu0 0
        %1255 = vmatpush1.bf16.msra.mxu0 0
        %1256 = vmatprep.subr.bf16.mxu0 0
        %1257 = vmatpush1.bf16.msra.mxu0 0
        %1258 = vmatprep.subr.bf16.mxu0 0
        %1259 = vmatpush1.bf16.msra.mxu0 0
        %1260 = vmatprep.subr.bf16.mxu0 0
        %1261 = vmatpush1.bf16.msra.mxu0 0
        %1262 = vmatprep.subr.bf16.mxu0 0
        %1263 = vmatpush1.bf16.msra.mxu0 0
        %1264 = vmatprep.subr.bf16.mxu0 0
        %1265 = vmatpush1.bf16.msra.mxu0 0
        %1266 = vmatprep.subr.bf16.mxu0 0
        %1267 = vmatpush1.bf16.msra.mxu0 0
        %1268 = vmatprep.subr.bf16.mxu0 0
        %1269 = vmatpush1.bf16.msra.mxu0 0
        %1270 = vmatprep.subr.bf16.mxu0 0
        %1271 = vmatpush1.bf16.msra.mxu0 0
        %1272 = vmatprep.subr.bf16.mxu0 0
        %1273 = vmatpush1.bf16.msra.mxu0 0
        %1274 = vmatprep.subr.bf16.mxu0 0
        %1275 = vmatpush1.bf16.msra.mxu0 0
        %1276 = vmatprep.subr.bf16.mxu0 0
        %1277 = vmatpush1.bf16.msra.mxu0 0
        %1278 = vmatprep.mubr.bf16.mxu0 0
        %1279 = vmatmul.mubr.bf16.gmra.mrb[0].mxu0 %v1244
        %v1280 = vpop.f32.mrb[0].mxu0
        %v1281 = vadd.f32 0.0, %v1280
        %v1282 = vpop.f32.mrb[0].mxu0
        %v1283 = vpop.f32.mrb[0].mxu0
        %v1284 = vadd.f32 0.0, %v1283
        %v1285 = vpop.f32.mrb[0].mxu0
        %1286 = vdwg.mxu0
        %v1288 = vsel %vm1242, %v1011, 0
        %1290 = vmatprep.subr.bf16.mxu0 0
        %1291 = vmatpush1.bf16.msra.mxu0 %v1216
        %1292 = vmatprep.subr.bf16.mxu0 0
        %1293 = vmatpush1.bf16.msra.mxu0 0
        %1294 = vmatprep.subr.bf16.mxu0 0
        %1295 = vmatpush1.bf16.msra.mxu0 0
        %1296 = vmatprep.subr.bf16.mxu0 0
        %1297 = vmatpush1.bf16.msra.mxu0 0
        %1298 = vmatprep.subr.bf16.mxu0 0
        %1299 = vmatpush1.bf16.msra.mxu0 0
        %1300 = vmatprep.subr.bf16.mxu0 0
        %1301 = vmatpush1.bf16.msra.mxu0 0
        %1302 = vmatprep.subr.bf16.mxu0 0
        %1303 = vmatpush1.bf16.msra.mxu0 0
        %1304 = vmatprep.subr.bf16.mxu0 0
        %1305 = vmatpush1.bf16.msra.mxu0 0
        %1306 = vmatprep.subr.bf16.mxu0 0
        %1307 = vmatpush1.bf16.msra.mxu0 0
        %1308 = vmatprep.subr.bf16.mxu0 0
        %1309 = vmatpush1.bf16.msra.mxu0 0
        %1310 = vmatprep.subr.bf16.mxu0 0
        %1311 = vmatpush1.bf16.msra.mxu0 0
        %1312 = vmatprep.subr.bf16.mxu0 0
        %1313 = vmatpush1.bf16.msra.mxu0 0
        %1314 = vmatprep.subr.bf16.mxu0 0
        %1315 = vmatpush1.bf16.msra.mxu0 0
        %1316 = vmatprep.subr.bf16.mxu0 0
        %1317 = vmatpush1.bf16.msra.mxu0 0
        %1318 = vmatprep.subr.bf16.mxu0 0
        %1319 = vmatpush1.bf16.msra.mxu0 0
        %1320 = vmatprep.subr.bf16.mxu0 0
        %1321 = vmatpush1.bf16.msra.mxu0 0
        %1322 = vmatprep.mubr.bf16.mxu0 0
        %1323 = vmatmul.mubr.bf16.gmra.mrb[0].mxu0 %v1288
        %v1324 = vpop.f32.mrb[0].mxu0
        %v1325 = vadd.f32 0.0, %v1324
        %v1326 = vpop.f32.mrb[0].mxu0
        %v1327 = vpop.f32.mrb[0].mxu0
        %v1328 = vadd.f32 0.0, %v1327
        %v1329 = vpop.f32.mrb[0].mxu0
        %1330 = vdwg.mxu0
        %v1332 = vsel %vm1242, %v1014, 0
        %1334 = vmatprep.subr.bf16.mxu0 0
        %1335 = vmatpush1.bf16.msra.mxu0 %v1220
        %1336 = vmatprep.subr.bf16.mxu0 0
        %1337 = vmatpush1.bf16.msra.mxu0 0
        %1338 = vmatprep.subr.bf16.mxu0 0
        %1339 = vmatpush1.bf16.msra.mxu0 0
        %1340 = vmatprep.subr.bf16.mxu0 0
        %1341 = vmatpush1.bf16.msra.mxu0 0
        %1342 = vmatprep.subr.bf16.mxu0 0
        %1343 = vmatpush1.bf16.msra.mxu0 0
        %1344 = vmatprep.subr.bf16.mxu0 0
        %1345 = vmatpush1.bf16.msra.mxu0 0
        %1346 = vmatprep.subr.bf16.mxu0 0
        %1347 = vmatpush1.bf16.msra.mxu0 0
        %1348 = vmatprep.subr.bf16.mxu0 0
        %1349 = vmatpush1.bf16.msra.mxu0 0
        %1350 = vmatprep.subr.bf16.mxu0 0
        %1351 = vmatpush1.bf16.msra.mxu0 0
        %1352 = vmatprep.subr.bf16.mxu0 0
        %1353 = vmatpush1.bf16.msra.mxu0 0
        %1354 = vmatprep.subr.bf16.mxu0 0
        %1355 = vmatpush1.bf16.msra.mxu0 0
        %1356 = vmatprep.subr.bf16.mxu0 0
        %1357 = vmatpush1.bf16.msra.mxu0 0
        %1358 = vmatprep.subr.bf16.mxu0 0
        %1359 = vmatpush1.bf16.msra.mxu0 0
        %1360 = vmatprep.subr.bf16.mxu0 0
        %1361 = vmatpush1.bf16.msra.mxu0 0
        %1362 = vmatprep.subr.bf16.mxu0 0
        %1363 = vmatpush1.bf16.msra.mxu0 0
        %1364 = vmatprep.subr.bf16.mxu0 0
        %1365 = vmatpush1.bf16.msra.mxu0 0
        %1366 = vmatprep.mubr.bf16.mxu0 0
        %1367 = vmatmul.mubr.bf16.gmra.mrb[0].mxu0 %v1332
        %v1368 = vpop.f32.mrb[0].mxu0
        %v1369 = vadd.f32 0.0, %v1368
        %v1370 = vpop.f32.mrb[0].mxu0
        %v1371 = vpop.f32.mrb[0].mxu0
        %v1372 = vadd.f32 0.0, %v1371
        %v1373 = vpop.f32.mrb[0].mxu0
        %1374 = vdwg.mxu0
        %v1376 = vsel %vm1242, %v1017, 0
        %1378 = vmatprep.subr.bf16.mxu0 0
        %1379 = vmatpush1.bf16.msra.mxu0 %v1224
        %1380 = vmatprep.subr.bf16.mxu0 0
        %1381 = vmatpush1.bf16.msra.mxu0 0
        %1382 = vmatprep.subr.bf16.mxu0 0
        %1383 = vmatpush1.bf16.msra.mxu0 0
        %1384 = vmatprep.subr.bf16.mxu0 0
        %1385 = vmatpush1.bf16.msra.mxu0 0
        %1386 = vmatprep.subr.bf16.mxu0 0
        %1387 = vmatpush1.bf16.msra.mxu0 0
        %1388 = vmatprep.subr.bf16.mxu0 0
        %1389 = vmatpush1.bf16.msra.mxu0 0
        %1390 = vmatprep.subr.bf16.mxu0 0
        %1391 = vmatpush1.bf16.msra.mxu0 0
        %1392 = vmatprep.subr.bf16.mxu0 0
        %1393 = vmatpush1.bf16.msra.mxu0 0
        %1394 = vmatprep.subr.bf16.mxu0 0
        %1395 = vmatpush1.bf16.msra.mxu0 0
        %1396 = vmatprep.subr.bf16.mxu0 0
        %1397 = vmatpush1.bf16.msra.mxu0 0
        %1398 = vmatprep.subr.bf16.mxu0 0
        %1399 = vmatpush1.bf16.msra.mxu0 0
        %1400 = vmatprep.subr.bf16.mxu0 0
        %1401 = vmatpush1.bf16.msra.mxu0 0
        %1402 = vmatprep.subr.bf16.mxu0 0
        %1403 = vmatpush1.bf16.msra.mxu0 0
        %1404 = vmatprep.subr.bf16.mxu0 0
        %1405 = vmatpush1.bf16.msra.mxu0 0
        %1406 = vmatprep.subr.bf16.mxu0 0
        %1407 = vmatpush1.bf16.msra.mxu0 0
        %1408 = vmatprep.subr.bf16.mxu0 0
        %1409 = vmatpush1.bf16.msra.mxu0 0
        %1410 = vmatprep.mubr.bf16.mxu0 0
        %1411 = vmatmul.mubr.bf16.gmra.mrb[0].mxu0 %v1376
        %v1412 = vpop.f32.mrb[0].mxu0
        %v1413 = vadd.f32 0.0, %v1412
        %v1414 = vpop.f32.mrb[0].mxu0
        %v1415 = vpop.f32.mrb[0].mxu0
        %v1416 = vadd.f32 0.0, %v1415
        %v1417 = vpop.f32.mrb[0].mxu0
        %1418 = vdwg.mxu0
        %v1420 = vsel %vm1242, %v1020, 0
        %1422 = vmatprep.subr.bf16.mxu0 0
        %1423 = vmatpush1.bf16.msra.mxu0 %v1228
        %1424 = vmatprep.subr.bf16.mxu0 0
        %1425 = vmatpush1.bf16.msra.mxu0 0
        %1426 = vmatprep.subr.bf16.mxu0 0
        %1427 = vmatpush1.bf16.msra.mxu0 0
        %1428 = vmatprep.subr.bf16.mxu0 0
        %1429 = vmatpush1.bf16.msra.mxu0 0
        %1430 = vmatprep.subr.bf16.mxu0 0
        %1431 = vmatpush1.bf16.msra.mxu0 0
        %1432 = vmatprep.subr.bf16.mxu0 0
        %1433 = vmatpush1.bf16.msra.mxu0 0
        %1434 = vmatprep.subr.bf16.mxu0 0
        %1435 = vmatpush1.bf16.msra.mxu0 0
        %1436 = vmatprep.subr.bf16.mxu0 0
        %1437 = vmatpush1.bf16.msra.mxu0 0
        %1438 = vmatprep.subr.bf16.mxu0 0
        %1439 = vmatpush1.bf16.msra.mxu0 0
        %1440 = vmatprep.subr.bf16.mxu0 0
        %1441 = vmatpush1.bf16.msra.mxu0 0
        %1442 = vmatprep.subr.bf16.mxu0 0
        %1443 = vmatpush1.bf16.msra.mxu0 0
        %1444 = vmatprep.subr.bf16.mxu0 0
        %1445 = vmatpush1.bf16.msra.mxu0 0
        %1446 = vmatprep.subr.bf16.mxu0 0
        %1447 = vmatpush1.bf16.msra.mxu0 0
        %1448 = vmatprep.subr.bf16.mxu0 0
        %1449 = vmatpush1.bf16.msra.mxu0 0
        %1450 = vmatprep.subr.bf16.mxu0 0
        %1451 = vmatpush1.bf16.msra.mxu0 0
        %1452 = vmatprep.subr.bf16.mxu0 0
        %1453 = vmatpush1.bf16.msra.mxu0 0
        %1454 = vmatprep.mubr.bf16.mxu0 0
        %1455 = vmatmul.mubr.bf16.gmra.mrb[0].mxu0 %v1420
        %v1456 = vpop.f32.mrb[0].mxu0
        %v1457 = vadd.f32 0.0, %v1456
        %v1458 = vpop.f32.mrb[0].mxu0
        %v1459 = vpop.f32.mrb[0].mxu0
        %v1460 = vadd.f32 0.0, %v1459
        %v1461 = vpop.f32.mrb[0].mxu0
        %1462 = vdwg.mxu0
        %v1464 = vsel %vm1242, %v1023, 0
        %1466 = vmatprep.subr.bf16.mxu0 0
        %1467 = vmatpush1.bf16.msra.mxu0 %v1232
        %1468 = vmatprep.subr.bf16.mxu0 0
        %1469 = vmatpush1.bf16.msra.mxu0 0
        %1470 = vmatprep.subr.bf16.mxu0 0
        %1471 = vmatpush1.bf16.msra.mxu0 0
        %1472 = vmatprep.subr.bf16.mxu0 0
        %1473 = vmatpush1.bf16.msra.mxu0 0
        %1474 = vmatprep.subr.bf16.mxu0 0
        %1475 = vmatpush1.bf16.msra.mxu0 0
        %1476 = vmatprep.subr.bf16.mxu0 0
        %1477 = vmatpush1.bf16.msra.mxu0 0
        %1478 = vmatprep.subr.bf16.mxu0 0
        %1479 = vmatpush1.bf16.msra.mxu0 0
        %1480 = vmatprep.subr.bf16.mxu0 0
        %1481 = vmatpush1.bf16.msra.mxu0 0
        %1482 = vmatprep.subr.bf16.mxu0 0
        %1483 = vmatpush1.bf16.msra.mxu0 0
        %1484 = vmatprep.subr.bf16.mxu0 0
        %1485 = vmatpush1.bf16.msra.mxu0 0
        %1486 = vmatprep.subr.bf16.mxu0 0
        %1487 = vmatpush1.bf16.msra.mxu0 0
        %1488 = vmatprep.subr.bf16.mxu0 0
        %1489 = vmatpush1.bf16.msra.mxu0 0
        %1490 = vmatprep.subr.bf16.mxu0 0
        %1491 = vmatpush1.bf16.msra.mxu0 0
        %1492 = vmatprep.subr.bf16.mxu0 0
        %1493 = vmatpush1.bf16.msra.mxu0 0
        %1494 = vmatprep.subr.bf16.mxu0 0
        %1495 = vmatpush1.bf16.msra.mxu0 0
        %1496 = vmatprep.subr.bf16.mxu0 0
        %1497 = vmatpush1.bf16.msra.mxu0 0
        %1498 = vmatprep.mubr.bf16.mxu0 0
        %1499 = vmatmul.mubr.bf16.gmra.mrb[0].mxu0 %v1464
        %v1500 = vpop.f32.mrb[0].mxu0
        %v1501 = vadd.f32 0.0, %v1500
        %v1502 = vpop.f32.mrb[0].mxu0
        %v1503 = vpop.f32.mrb[0].mxu0
        %v1504 = vadd.f32 0.0, %v1503
        %v1505 = vpop.f32.mrb[0].mxu0
        %1506 = vdwg.mxu0
        %v1508 = vsel %vm1242, %v1026, 0
        %1510 = vmatprep.subr.bf16.mxu0 0
        %1511 = vmatpush1.bf16.msra.mxu0 %v1236
        %1512 = vmatprep.subr.bf16.mxu0 0
        %1513 = vmatpush1.bf16.msra.mxu0 0
        %1514 = vmatprep.subr.bf16.mxu0 0
        %1515 = vmatpush1.bf16.msra.mxu0 0
        %1516 = vmatprep.subr.bf16.mxu0 0
        %1517 = vmatpush1.bf16.msra.mxu0 0
        %1518 = vmatprep.subr.bf16.mxu0 0
        %1519 = vmatpush1.bf16.msra.mxu0 0
        %1520 = vmatprep.subr.bf16.mxu0 0
        %1521 = vmatpush1.bf16.msra.mxu0 0
        %1522 = vmatprep.subr.bf16.mxu0 0
        %1523 = vmatpush1.bf16.msra.mxu0 0
        %1524 = vmatprep.subr.bf16.mxu0 0
        %1525 = vmatpush1.bf16.msra.mxu0 0
        %1526 = vmatprep.subr.bf16.mxu0 0
        %1527 = vmatpush1.bf16.msra.mxu0 0
        %1528 = vmatprep.subr.bf16.mxu0 0
        %1529 = vmatpush1.bf16.msra.mxu0 0
        %1530 = vmatprep.subr.bf16.mxu0 0
        %1531 = vmatpush1.bf16.msra.mxu0 0
        %1532 = vmatprep.subr.bf16.mxu0 0
        %1533 = vmatpush1.bf16.msra.mxu0 0
        %1534 = vmatprep.subr.bf16.mxu0 0
        %1535 = vmatpush1.bf16.msra.mxu0 0
        %1536 = vmatprep.subr.bf16.mxu0 0
        %1537 = vmatpush1.bf16.msra.mxu0 0
        %1538 = vmatprep.subr.bf16.mxu0 0
        %1539 = vmatpush1.bf16.msra.mxu0 0
        %1540 = vmatprep.subr.bf16.mxu0 0
        %1541 = vmatpush1.bf16.msra.mxu0 0
        %1542 = vmatprep.mubr.bf16.mxu0 0
        %1543 = vmatmul.mubr.bf16.gmra.mrb[0].mxu0 %v1508
        %v1544 = vpop.f32.mrb[0].mxu0
        %v1545 = vadd.f32 0.0, %v1544
        %v1546 = vpop.f32.mrb[0].mxu0
        %v1547 = vpop.f32.mrb[0].mxu0
        %v1548 = vadd.f32 0.0, %v1547
        %v1549 = vpop.f32.mrb[0].mxu0
        %1550 = vdwg.mxu0
        %v1552 = vsel %vm1242, %v1029, 0
        %1554 = vmatprep.subr.bf16.mxu0 0
        %1555 = vmatpush1.bf16.msra.mxu0 %v1240
        %1556 = vmatprep.subr.bf16.mxu0 0
        %1557 = vmatpush1.bf16.msra.mxu0 0
        %1558 = vmatprep.subr.bf16.mxu0 0
        %1559 = vmatpush1.bf16.msra.mxu0 0
        %1560 = vmatprep.subr.bf16.mxu0 0
        %1561 = vmatpush1.bf16.msra.mxu0 0
        %1562 = vmatprep.subr.bf16.mxu0 0
        %1563 = vmatpush1.bf16.msra.mxu0 0
        %1564 = vmatprep.subr.bf16.mxu0 0
        %1565 = vmatpush1.bf16.msra.mxu0 0
        %1566 = vmatprep.subr.bf16.mxu0 0
        %1567 = vmatpush1.bf16.msra.mxu0 0
        %1568 = vmatprep.subr.bf16.mxu0 0
        %1569 = vmatpush1.bf16.msra.mxu0 0
        %1570 = vmatprep.subr.bf16.mxu0 0
        %1571 = vmatpush1.bf16.msra.mxu0 0
        %1572 = vmatprep.subr.bf16.mxu0 0
        %1573 = vmatpush1.bf16.msra.mxu0 0
        %1574 = vmatprep.subr.bf16.mxu0 0
        %1575 = vmatpush1.bf16.msra.mxu0 0
        %1576 = vmatprep.subr.bf16.mxu0 0
        %1577 = vmatpush1.bf16.msra.mxu0 0
        %1578 = vmatprep.subr.bf16.mxu0 0
        %1579 = vmatpush1.bf16.msra.mxu0 0
        %1580 = vmatprep.subr.bf16.mxu0 0
        %1581 = vmatpush1.bf16.msra.mxu0 0
        %1582 = vmatprep.subr.bf16.mxu0 0
        %1583 = vmatpush1.bf16.msra.mxu0 0
        %1584 = vmatprep.subr.bf16.mxu0 0
        %1585 = vmatpush1.bf16.msra.mxu0 0
        %1586 = vmatprep.mubr.bf16.mxu0 0
        %1587 = vmatmul.mubr.bf16.gmra.mrb[0].mxu0 %v1552
        %v1588 = vpop.f32.mrb[0].mxu0
        %v1589 = vadd.f32 0.0, %v1588
        %v1590 = vpop.f32.mrb[0].mxu0
        %v1591 = vpop.f32.mrb[0].mxu0
        %v1592 = vadd.f32 0.0, %v1591
        %v1593 = vpop.f32.mrb[0].mxu0
        %1594 = vdwg.mxu0
        %v1595 = vpack.c.bf16 %v1284, %v1281
        %v1596 = vpack.c.bf16 %v1328, %v1325
        %v1597 = vpack.c.bf16 %v1372, %v1369
        %v1598 = vpack.c.bf16 %v1416, %v1413
        %v1599 = vpack.c.bf16 %v1460, %v1457
        %v1600 = vpack.c.bf16 %v1504, %v1501
        %v1601 = vpack.c.bf16 %v1548, %v1545
        %v1602 = vpack.c.bf16 %v1592, %v1589
        %v1605 = vpack.i.b16 %v1596, %v1595
        %v1607 = vshrl.u32 %v1595, 16
        %v1608 = vshrl.u32 %v1596, 16
        %v1609 = vpack.i.b16 %v1608, %v1607
        %v1613 = vpack.i.b16 %v1598, %v1597
        %v1615 = vshrl.u32 %v1597, 16
        %v1616 = vshrl.u32 %v1598, 16
        %v1617 = vpack.i.b16 %v1616, %v1615
        %v1621 = vpack.i.b16 %v1600, %v1599
        %v1623 = vshrl.u32 %v1599, 16
        %v1624 = vshrl.u32 %v1600, 16
        %v1625 = vpack.i.b16 %v1624, %v1623
        %v1629 = vpack.i.b16 %v1602, %v1601
        %v1631 = vshrl.u32 %v1601, 16
        %v1632 = vshrl.u32 %v1602, 16
        %v1633 = vpack.i.b16 %v1632, %v1631
        %v1635 = vcombine.low %v1605, %v1621
        %v1636 = vcombine.high %v1605, %v1621
        %v1638 = vunpack.c.l.s4 1983009808
        %v1639 = vunpack.c.0.s8 %v1638
        %v1640 = vlaneseq
        %v1641 = vshrl.u32 %v1640, 7
        %v1642 = vsub.s32 %v1639, %v1641
        %v1643 = vrot.slane %v1635, %v1642
        %v1645 = vunpack.c.l.s4 1983009808
        %v1646 = vunpack.c.0.s8 %v1645
        %v1647 = vlaneseq
        %v1648 = vshrl.u32 %v1647, 7
        %v1649 = vsub.s32 %v1646, %v1648
        %v1650 = vrot.slane %v1636, %v1649
        %v1651 = vcombine.low %v1613, %v1629
        %v1652 = vcombine.high %v1613, %v1629
        %v1654 = vunpack.c.l.s4 1983009808
        %v1655 = vunpack.c.0.s8 %v1654
        %v1656 = vlaneseq
        %v1657 = vshrl.u32 %v1656, 7
        %v1658 = vsub.s32 %v1655, %v1657
        %v1659 = vrot.slane %v1651, %v1658
        %v1661 = vunpack.c.l.s4 1983009808
        %v1662 = vunpack.c.0.s8 %v1661
        %v1663 = vlaneseq
        %v1664 = vshrl.u32 %v1663, 7
        %v1665 = vsub.s32 %v1662, %v1664
        %v1666 = vrot.slane %v1652, %v1665
        %v1667 = vcombine.low %v1643, %v1659
        %v1668 = vcombine.high %v1643, %v1659
        %v1670 = vunpack.c.l.s4 1934713408
        %v1671 = vunpack.c.0.s8 %v1670
        %v1672 = vlaneseq
        %v1673 = vshrl.u32 %v1672, 7
        %v1674 = vsub.s32 %v1671, %v1673
        %v1675 = vrot.slane %v1667, %v1674
        %v1677 = vunpack.c.l.s4 1934713408
        %v1678 = vunpack.c.0.s8 %v1677
        %v1679 = vlaneseq
        %v1680 = vshrl.u32 %v1679, 7
        %v1681 = vsub.s32 %v1678, %v1680
        %v1682 = vrot.slane %v1668, %v1681
        %v1683 = vcombine.low %v1650, %v1666
        %v1684 = vcombine.high %v1650, %v1666
        %v1686 = vunpack.c.l.s4 1934713408
        %v1687 = vunpack.c.0.s8 %v1686
        %v1688 = vlaneseq
        %v1689 = vshrl.u32 %v1688, 7
        %v1690 = vsub.s32 %v1687, %v1689
        %v1691 = vrot.slane %v1683, %v1690
        %v1693 = vunpack.c.l.s4 1934713408
        %v1694 = vunpack.c.0.s8 %v1693
        %v1695 = vlaneseq
        %v1696 = vshrl.u32 %v1695, 7
        %v1697 = vsub.s32 %v1694, %v1696
        %v1698 = vrot.slane %v1684, %v1697
        %v1699 = vcombine.high %v1675, 0
        %v1700 = vcombine.high %v1682, 0
        %v1701 = vcombine.high %v1691, 0
        %v1702 = vcombine.high %v1698, 0
        %v1703 = vcombine.low %v1609, %v1625
        %v1704 = vcombine.high %v1609, %v1625
        %v1706 = vunpack.c.l.s4 1983009808
        %v1707 = vunpack.c.0.s8 %v1706
        %v1708 = vlaneseq
        %v1709 = vshrl.u32 %v1708, 7
        %v1710 = vsub.s32 %v1707, %v1709
        %v1711 = vrot.slane %v1703, %v1710
        %v1713 = vunpack.c.l.s4 1983009808
        %v1714 = vunpack.c.0.s8 %v1713
        %v1715 = vlaneseq
        %v1716 = vshrl.u32 %v1715, 7
        %v1717 = vsub.s32 %v1714, %v1716
        %v1718 = vrot.slane %v1704, %v1717
        %v1719 = vcombine.low %v1617, %v1633
        %v1720 = vcombine.high %v1617, %v1633
        %v1722 = vunpack.c.l.s4 1983009808
        %v1723 = vunpack.c.0.s8 %v1722
        %v1724 = vlaneseq
        %v1725 = vshrl.u32 %v1724, 7
        %v1726 = vsub.s32 %v1723, %v1725
        %v1727 = vrot.slane %v1719, %v1726
        %v1729 = vunpack.c.l.s4 1983009808
        %v1730 = vunpack.c.0.s8 %v1729
        %v1731 = vlaneseq
        %v1732 = vshrl.u32 %v1731, 7
        %v1733 = vsub.s32 %v1730, %v1732
        %v1734 = vrot.slane %v1720, %v1733
        %v1735 = vcombine.low %v1711, %v1727
        %v1736 = vcombine.high %v1711, %v1727
        %v1738 = vunpack.c.l.s4 1934713408
        %v1739 = vunpack.c.0.s8 %v1738
        %v1740 = vlaneseq
        %v1741 = vshrl.u32 %v1740, 7
        %v1742 = vsub.s32 %v1739, %v1741
        %v1743 = vrot.slane %v1735, %v1742
        %v1745 = vunpack.c.l.s4 1934713408
        %v1746 = vunpack.c.0.s8 %v1745
        %v1747 = vlaneseq
        %v1748 = vshrl.u32 %v1747, 7
        %v1749 = vsub.s32 %v1746, %v1748
        %v1750 = vrot.slane %v1736, %v1749
        %v1751 = vcombine.low %v1718, %v1734
        %v1752 = vcombine.high %v1718, %v1734
        %v1754 = vunpack.c.l.s4 1934713408
        %v1755 = vunpack.c.0.s8 %v1754
        %v1756 = vlaneseq
        %v1757 = vshrl.u32 %v1756, 7
        %v1758 = vsub.s32 %v1755, %v1757
        %v1759 = vrot.slane %v1751, %v1758
        %v1761 = vunpack.c.l.s4 1934713408
        %v1762 = vunpack.c.0.s8 %v1761
        %v1763 = vlaneseq
        %v1764 = vshrl.u32 %v1763, 7
        %v1765 = vsub.s32 %v1762, %v1764
        %v1766 = vrot.slane %v1752, %v1765
        %v1767 = vcombine.high %v1743, 0
        %v1768 = vcombine.high %v1750, 0
        %v1769 = vcombine.high %v1759, 0
        %v1770 = vcombine.high %v1766, 0
        %1772 = vrot.lane.b32.xlu0 %v1743, 16
        %v1773 = vpop.permute.xlu0 %1772
        %1775 = vrot.lane.b32.xlu0 %v1699, 32
        %v1776 = vpop.permute.xlu0 %1775
        %1778 = vrot.lane.b32.xlu0 %v1767, 48
        %v1779 = vpop.permute.xlu0 %1778
        %1781 = vrot.lane.b32.xlu0 %v1682, 64
        %v1782 = vpop.permute.xlu0 %1781
        %1784 = vrot.lane.b32.xlu0 %v1750, 80
        %v1785 = vpop.permute.xlu0 %1784
        %1787 = vrot.lane.b32.xlu0 %v1700, 96
        %v1788 = vpop.permute.xlu0 %1787
        %1790 = vrot.lane.b32.xlu0 %v1768, 112
        %v1791 = vpop.permute.xlu0 %1790
        %1793 = vrot.lane.b32.xlu0 %v1759, 16
        %v1794 = vpop.permute.xlu0 %1793
        %1796 = vrot.lane.b32.xlu0 %v1701, 32
        %v1797 = vpop.permute.xlu0 %1796
        %1799 = vrot.lane.b32.xlu0 %v1769, 48
        %v1800 = vpop.permute.xlu0 %1799
        %1802 = vrot.lane.b32.xlu0 %v1698, 64
        %v1803 = vpop.permute.xlu0 %1802
        %1805 = vrot.lane.b32.xlu0 %v1766, 80
        %v1806 = vpop.permute.xlu0 %1805
        %1808 = vrot.lane.b32.xlu0 %v1702, 96
        %v1809 = vpop.permute.xlu0 %1808
        %1811 = vrot.lane.b32.xlu0 %v1770, 112
        %v1812 = vpop.permute.xlu0 %1811
        %v1815 = vsel %vm1242, %v1675, %v1773
        %vm1816 = vcmask 261120
        %v1818 = vsel %vm1816, %v1815, %v1776
        %vm1819 = vcmask 392192
        %v1821 = vsel %vm1819, %v1818, %v1779
        %vm1822 = vcmask 523264
        %v1824 = vsel %vm1822, %v1821, %v1782
        %vm1825 = vcmask 654336
        %v1827 = vsel %vm1825, %v1824, %v1785
        %vm1828 = vcmask 785408
        %v1830 = vsel %vm1828, %v1827, %v1788
        %vm1831 = vcmask 916480
        %v1833 = vsel %vm1831, %v1830, %v1791
        %v1836 = vsel %vm1242, %v1691, %v1794
        %v1838 = vsel %vm1816, %v1836, %v1797
        %v1840 = vsel %vm1819, %v1838, %v1800
        %v1842 = vsel %vm1822, %v1840, %v1803
        %v1844 = vsel %vm1825, %v1842, %v1806
        %v1846 = vsel %vm1828, %v1844, %v1809
        %v1848 = vsel %vm1831, %v1846, %v1812
        %v1850 = vsel %vm635, %v628, 0
        %v1852 = vsel %vm639, %v1833, 0
        %v1854 = vsel %vm639, %v1848, 0
        %1856 = vmatprep.subr.bf16.mxu0 %v1854
        %1857 = vmatpush1.bf16.msra.mxu0 %v1852
        %1858 = vmatprep.subr.bf16.mxu0 0
        %1859 = vmatpush1.bf16.msra.mxu0 0
        %1860 = vmatprep.subr.bf16.mxu0 0
        %1861 = vmatpush1.bf16.msra.mxu0 0
        %1862 = vmatprep.subr.bf16.mxu0 0
        %1863 = vmatpush1.bf16.msra.mxu0 0
        %1864 = vmatprep.subr.bf16.mxu0 0
        %1865 = vmatpush1.bf16.msra.mxu0 0
        %1866 = vmatprep.subr.bf16.mxu0 0
        %1867 = vmatpush1.bf16.msra.mxu0 0
        %1868 = vmatprep.subr.bf16.mxu0 0
        %1869 = vmatpush1.bf16.msra.mxu0 0
        %1870 = vmatprep.subr.bf16.mxu0 0
        %1871 = vmatpush1.bf16.msra.mxu0 0
        %1872 = vmatprep.subr.bf16.mxu0 0
        %1873 = vmatpush1.bf16.msra.mxu0 0
        %1874 = vmatprep.subr.bf16.mxu0 0
        %1875 = vmatpush1.bf16.msra.mxu0 0
        %1876 = vmatprep.subr.bf16.mxu0 0
        %1877 = vmatpush1.bf16.msra.mxu0 0
        %1878 = vmatprep.subr.bf16.mxu0 0
        %1879 = vmatpush1.bf16.msra.mxu0 0
        %1880 = vmatprep.subr.bf16.mxu0 0
        %1881 = vmatpush1.bf16.msra.mxu0 0
        %1882 = vmatprep.subr.bf16.mxu0 0
        %1883 = vmatpush1.bf16.msra.mxu0 0
        %1884 = vmatprep.subr.bf16.mxu0 0
        %1885 = vmatpush1.bf16.msra.mxu0 0
        %1886 = vmatprep.subr.bf16.mxu0 0
        %1887 = vmatpush1.bf16.msra.mxu0 0
        %1888 = vmatprep.mubr.bf16.mxu0 0
        %1889 = vmatmul.mubr.bf16.gmra.mrb[0].mxu0 %v1850
        %v1890 = vpop.f32.mrb[0].mxu0
        %v1891 = vadd.f32 0.0, %v1890
        %v1892 = vpop.f32.mrb[0].mxu0
        %v1893 = vadd.f32 0.0, %v1892
        %v1894 = vpop.f32.mrb[0].mxu0
        %v1895 = vpop.f32.mrb[0].mxu0
        %1896 = vdwg.mxu0
        %v1898 = vsel %vm635, %v627, 0
        %1900 = vmatprep.subr.bf16.mxu0 %v644
        %1901 = vmatpush1.bf16.msra.mxu0 %v641
        %1902 = vmatprep.subr.bf16.mxu0 0
        %1903 = vmatpush1.bf16.msra.mxu0 0
        %1904 = vmatprep.subr.bf16.mxu0 0
        %1905 = vmatpush1.bf16.msra.mxu0 0
        %1906 = vmatprep.subr.bf16.mxu0 0
        %1907 = vmatpush1.bf16.msra.mxu0 0
        %1908 = vmatprep.subr.bf16.mxu0 0
        %1909 = vmatpush1.bf16.msra.mxu0 0
        %1910 = vmatprep.subr.bf16.mxu0 0
        %1911 = vmatpush1.bf16.msra.mxu0 0
        %1912 = vmatprep.subr.bf16.mxu0 0
        %1913 = vmatpush1.bf16.msra.mxu0 0
        %1914 = vmatprep.subr.bf16.mxu0 0
        %1915 = vmatpush1.bf16.msra.mxu0 0
        %1916 = vmatprep.subr.bf16.mxu0 0
        %1917 = vmatpush1.bf16.msra.mxu0 0
        %1918 = vmatprep.subr.bf16.mxu0 0
        %1919 = vmatpush1.bf16.msra.mxu0 0
        %1920 = vmatprep.subr.bf16.mxu0 0
        %1921 = vmatpush1.bf16.msra.mxu0 0
        %1922 = vmatprep.subr.bf16.mxu0 0
        %1923 = vmatpush1.bf16.msra.mxu0 0
        %1924 = vmatprep.subr.bf16.mxu0 0
        %1925 = vmatpush1.bf16.msra.mxu0 0
        %1926 = vmatprep.subr.bf16.mxu0 0
        %1927 = vmatpush1.bf16.msra.mxu0 0
        %1928 = vmatprep.subr.bf16.mxu0 0
        %1929 = vmatpush1.bf16.msra.mxu0 0
        %1930 = vmatprep.subr.bf16.mxu0 0
        %1931 = vmatpush1.bf16.msra.mxu0 0
        %1932 = vmatprep.mubr.bf16.mxu0 0
        %1933 = vmatmul.mubr.bf16.gmra.mrb[0].mxu0 %v1898
        %v1934 = vpop.f32.mrb[0].mxu0
        %v1935 = vadd.f32 %v1891, %v1934
        %v1936 = vpop.f32.mrb[0].mxu0
        %v1937 = vadd.f32 %v1893, %v1936
        %v1938 = vpop.f32.mrb[0].mxu0
        %v1939 = vpop.f32.mrb[0].mxu0
        %1940 = vdwg.mxu0
        %1941 = vset.pattern.permute.xlu0 4
        %1942 = vperm.xlu0 %1941, %v629
        %v1943 = vpop.permute.xlu0 %1942
        %v1945 = vadd.f32 %v1935, %v1943
        %v1946 = vadd.f32 %v1937, %v1943
        %v1947 = vadd.f32 %v1945, %v1946
        %1948 = vadd.xlane.f32.xlu0 %v1947
        %v1949 = vpop.xlane.xlu0 %1948
        %v1950 = vrcp.pop 256.0
        %v1951 = vmul.f32 %v1949, %v1950
        %v1952 = vmul.f32 %v1945, %v1945
        %v1953 = vmul.f32 %v1946, %v1946
        %v1954 = vadd.f32 %v1952, %v1953
        %1955 = vadd.xlane.f32.xlu0 %v1954
        %v1956 = vpop.xlane.xlu0 %1955
        %v1957 = vmul.f32 %v1956, %v1950
        %v1958 = vmul.f32 %v1951, %v1951
        %v1959 = vsub.f32 %v1957, %v1958
        %v1960 = vsub.f32 %v1945, %v1951
        %v1961 = vsub.f32 %v1946, %v1951
        %v1962 = vadd.f32 %v1959, 1e-05
        %v1963 = vrsqrt.pop %v1962
        %v1964 = vmul.f32 %v1960, %v1963
        %v1965 = vmul.f32 %v1961, %v1963
        %v1966 = vadd.f32 %v619, %v1964
        %v1967 = vadd.f32 %v620, %v1965
        %p1968 = scmp.ne.s32.totalorder %s41, 1
        // Predicated region
        $region97: #{tpu_custom_call.1} parent=55 // pred_check
          %p1969 = pneg %p1968
        $region98: #{tpu_custom_call.1} parent=55 // pred_check_branch
          %1971 = sbr.rel (%p1969) target = $region100
        $region99: #{tpu_custom_call.1} parent=55 // pred_region
          %1972 = vst [vmem:[#allocation2] sm:$0xff] %v1966
          %1973 = vst [vmem:[#allocation2 + $0x8] sm:$0xff] %v1967
        $region100: #{tpu_custom_call.1} parent=55 // pred_fallthru
          _
        %p1974 = scmp.eq.s32.totalorder %s41, 1
        // Predicated region
        $region101: #{tpu_custom_call.1} parent=55 // pred_check
          %p1975 = pneg %p1974
        $region102: #{tpu_custom_call.1} parent=55 // pred_check_branch
          %1977 = sbr.rel (%p1975) target = $region104
        $region103: #{tpu_custom_call.1} parent=55 // pred_region
          %v1978 = vld [vmem:[#allocation15] sm:$0x3]
          %v1979 = vpack.c.bf16 %v1966, %v1966
          %v1980 = vpack.c.bf16 %v1967, %v1967
          %v1981 = vld [vmem:[#allocation17] sm:$0xf]
          %1983 = vset.pattern.permute.xlu0 0
          %1984 = vperm.xlu0 %1983, %v1981
          %v1985 = vpop.permute.xlu0 %1984
          %v1988 = vsel %vm635, %v1978, 0
          %v1991 = vsel %vm639, %v1979, 0
          %v1994 = vsel %vm639, %v1980, 0
          %1996 = vmatprep.subr.bf16.mxu0 %v1994
          %1997 = vmatpush1.bf16.msra.mxu0 %v1991
          %1998 = vmatprep.subr.bf16.mxu0 0
          %1999 = vmatpush1.bf16.msra.mxu0 0
          %2000 = vmatprep.subr.bf16.mxu0 0
          %2001 = vmatpush1.bf16.msra.mxu0 0
          %2002 = vmatprep.subr.bf16.mxu0 0
          %2003 = vmatpush1.bf16.msra.mxu0 0
          %2004 = vmatprep.subr.bf16.mxu0 0
          %2005 = vmatpush1.bf16.msra.mxu0 0
          %2006 = vmatprep.subr.bf16.mxu0 0
          %2007 = vmatpush1.bf16.msra.mxu0 0
          %2008 = vmatprep.subr.bf16.mxu0 0
          %2009 = vmatpush1.bf16.msra.mxu0 0
          %2010 = vmatprep.subr.bf16.mxu0 0
          %2011 = vmatpush1.bf16.msra.mxu0 0
          %2012 = vmatprep.subr.bf16.mxu0 0
          %2013 = vmatpush1.bf16.msra.mxu0 0
          %2014 = vmatprep.subr.bf16.mxu0 0
          %2015 = vmatpush1.bf16.msra.mxu0 0
          %2016 = vmatprep.subr.bf16.mxu0 0
          %2017 = vmatpush1.bf16.msra.mxu0 0
          %2018 = vmatprep.subr.bf16.mxu0 0
          %2019 = vmatpush1.bf16.msra.mxu0 0
          %2020 = vmatprep.subr.bf16.mxu0 0
          %2021 = vmatpush1.bf16.msra.mxu0 0
          %2022 = vmatprep.subr.bf16.mxu0 0
          %2023 = vmatpush1.bf16.msra.mxu0 0
          %2024 = vmatprep.subr.bf16.mxu0 0
          %2025 = vmatpush1.bf16.msra.mxu0 0
          %2026 = vmatprep.subr.bf16.mxu0 0
          %2027 = vmatpush1.bf16.msra.mxu0 0
          %2028 = vmatprep.mubr.bf16.mxu0 0
          %2029 = vmatmul.mubr.bf16.gmra.mrb[0].mxu0 %v1988
          %v2030 = vpop.f32.mrb[0].mxu0
          %v2031 = vadd.f32 %v1985, %v2030
          %v2032 = vpop.f32.mrb[0].mxu0
          %v2033 = vadd.f32 %v1985, %v2032
          %v2034 = vpop.f32.mrb[0].mxu0
          %v2035 = vpop.f32.mrb[0].mxu0
          %2036 = vdwg.mxu0
          %v2039 = vcombine.low %v2031, %v2033
          %2041 = vst [vmem:[%s607] sm:$0xff] %v2039
        $region104: #{tpu_custom_call.1} parent=55 // pred_fallthru
          _
        %s2042 = sand.u32 %s280, 1
        %s2043 = scalar_lea.sflag [#allocation5], %s2042
        %s2044 = sand.u32 %s280, 1
        %s2045 = smul.addr %s2044, 8
        %s2046 = scalar_lea.vmem [#allocation18], %s2045
        // Predicated region
        $region105: #{tpu_custom_call.1} parent=55 // pred_check
          %p2047 = pneg %p290
        $region106: #{tpu_custom_call.1} parent=55 // pred_check_branch
          %2049 = sbr.rel (%p2047) target = $region108
        $region107: #{tpu_custom_call.1} parent=55 // pred_region
          %s2050 = smul.u32 2, %s40
          %s2052 = ssub.s32 128, 128
          %2053 = vsyncadd %s2043, %s2052
          %s2054 = smul.addr %s2050, 64
          %s2055 = scalar_lea.hbm %s9, %s2054
          %s2057 = sshll.u32 %s2046, 4
          %s2058 = int_to_ptr.vmem [resolvable:$true] %s2057
          %2060 = dma.vmem_to_hbm [thread:$0]  %s2058, 128, %s2055, %s2043
        $region108: #{tpu_custom_call.1} parent=55 // pred_fallthru
          _
      $region56: #{tpu_custom_call.1} parent=5 // pred_fallthru
        _
      %p2061 = scmp.le.s32.totalorder 2, %s31
      // Predicated region
      $region109: #{tpu_custom_call.1} parent=5 // pred_check
        %p2062 = pneg %p2061
      $region110: #{tpu_custom_call.1} parent=5 // pred_check_branch
        %2064 = sbr.rel (%p2062) target = $region112
      $region111: #{tpu_custom_call.1} parent=5 // pred_region
        %s2065 = ssub.s32 %s31, 2
        // Predicated region
        $region113: #{tpu_custom_call.1} parent=111 // pred_check
          %p2066 = pneg %p296
        $region114: #{tpu_custom_call.1} parent=111 // pred_check_branch
          %2068 = sbr.rel (%p2066) target = $region116
        $region115: #{tpu_custom_call.1} parent=111 // pred_region
          %s2069 = sand.u32 %s281, 1
          %s2070 = scalar_lea.sflag [#allocation5], %s2069
          %s2071 = sand.u32 %s281, 1
          %s2072 = smul.addr %s2071, 8
          %s2073 = scalar_lea.vmem [#allocation18], %s2072
          %2074 = dma.done %s2070, 128
        $region116: #{tpu_custom_call.1} parent=111 // pred_fallthru
          _
      $region112: #{tpu_custom_call.1} parent=5 // pred_fallthru
        _
    $region6: #{tpu_custom_call.1} parent=1 // loop_footer
      %s35 = sadd.s32 1, %s31
    $region7: #{tpu_custom_call.1} parent=1 // loop_footer_branch
      %30 = sbr.rel target = $region3
    $region8: #{tpu_custom_call.1} parent=1 // loop_exit
      _
    %2075 = vsyncpa [#allocation4], 1
    %s2076 = scalar_lea.sflag [#allocation4], 1
    %2077 = vsyncpa %s2076, 1
    %2078 = vsyncpa [#allocation7], 1
    %s2079 = scalar_lea.sflag [#allocation7], 1
    %2080 = vsyncpa %s2079, 1
    %2081 = vsyncpa [#allocation10], 1
    %s2082 = scalar_lea.sflag [#allocation10], 1
    %2083 = vsyncpa %s2082, 1
    %2084 = vsyncpa [#allocation13], 1
    %s2085 = scalar_lea.sflag [#allocation13], 1
    %2086 = vsyncpa %s2085, 1
    %2087 = vsyncpa [#allocation16], 1
    %2088 = vsyncpa [#allocation5], 1
    %s2089 = scalar_lea.sflag [#allocation5], 1
    %2090 = vsyncpa %s2089, 1

</llo_original>
